<compile_context>
chip_gen: v5e
topology: v5e:2x2
jax: 0.10.0
libtpu: 0.0.40
codegen_flags: <defaults>
</compile_context>

<pallas_src>
import jax
import jax.numpy as jnp
from jax.experimental import pallas as pl
from jax.experimental.pallas import tpu as pltpu


def _round_up(x: int, m: int) -> int:
    return (x + m - 1) // m * m


def actor_kernel(x_ref, w1_ref, b1_ref, w2_ref, b2_ref, w3_ref, b3_ref,
                 w4_ref, b4_ref, out_ref):
    """Fused forward: relu(fc1) -> relu(fc2) -> relu(fc3) -> tanh(fc4).

    x_ref: (tm, 256) bf16 batch tile.  w*/b* are whole (padded, lane-aligned)
    weight/bias arrays held VMEM-resident across the batch grid.  Matmuls run
    bf16 x bf16 -> f32 on the MXU; bias/relu/tanh in f32 on the VPU/EUP; each
    intermediate is cast back to bf16 immediately before the next dot.
    """
    x = x_ref[...]                                                      # bf16
    h = jnp.dot(x, w1_ref[...], preferred_element_type=jnp.float32) + b1_ref[...]
    h = jnp.maximum(h, 0.0).astype(jnp.bfloat16)
    h = jnp.dot(h, w2_ref[...], preferred_element_type=jnp.float32) + b2_ref[...]
    h = jnp.maximum(h, 0.0).astype(jnp.bfloat16)
    h = jnp.dot(h, w3_ref[...], preferred_element_type=jnp.float32) + b3_ref[...]
    h = jnp.maximum(h, 0.0).astype(jnp.bfloat16)
    y = jnp.dot(h, w4_ref[...], preferred_element_type=jnp.float32) + b4_ref[...]
    out_ref[...] = jnp.tanh(y)                                          # f32


def actor_net_forward(x, padded_params, action_size=39):
    """Runs the fused ActorNet forward pass; returns (batch, action_size) f32."""
    batch, state = x.shape
    s_pad = padded_params["w1"].shape[0]
    a_pad = padded_params["w4"].shape[1]

    # Batch tile: 128 rows for big batches (good MXU M), else round batch to 8.
    tm = 128 if batch >= 128 else max(8, _round_up(batch, 8))
    b_pad = _round_up(batch, tm)

    # Zero-pad batch rows and state columns; cast activations to bf16.
    xp = jnp.zeros((b_pad, s_pad), jnp.bfloat16)
    xp = xp.at[:batch, :state].set(x.astype(jnp.bfloat16))

    grid = (b_pad // tm,)

    def tile_map(i):
        return (i, 0)

    def const_map(i):
        return (0, 0)

    w1, b1 = padded_params["w1"], padded_params["b1"]
    w2, b2 = padded_params["w2"], padded_params["b2"]
    w3, b3 = padded_params["w3"], padded_params["b3"]
    w4, b4 = padded_params["w4"], padded_params["b4"]

    in_specs = [
        pl.BlockSpec((tm, s_pad), tile_map),      # x tile, walks the batch
        pl.BlockSpec(w1.shape, const_map),        # weights/biases: constant
        pl.BlockSpec(b1.shape, const_map),        # block -> DMA'd once, stay
        pl.BlockSpec(w2.shape, const_map),        # VMEM-resident across grid
        pl.BlockSpec(b2.shape, const_map),
        pl.BlockSpec(w3.shape, const_map),
        pl.BlockSpec(b3.shape, const_map),
        pl.BlockSpec(w4.shape, const_map),
        pl.BlockSpec(b4.shape, const_map),
    ]
    out_spec = pl.BlockSpec((tm, a_pad), tile_map)

    out = pl.pallas_call(
        actor_kernel,
        out_shape=jax.ShapeDtypeStruct((b_pad, a_pad), jnp.float32),
        grid=grid,
        in_specs=in_specs,
        out_specs=out_spec,
        compiler_params=pltpu.CompilerParams(
            dimension_semantics=("parallel",),    # shards batch tiles on v7x
            vmem_limit_bytes=32 * 1024 * 1024,
        ),
    )(xp, w1, b1, w2, b2, w3, b3, w4, b4)

    return out[:batch, :action_size]


def init_actor_params(key, state_size=212, action_size=39,
                      fc1_size=512, fc2_size=265, fc3_size=128):
    """Deterministic init matching torch.nn.Linear default:
    U(-1/sqrt(fan_in), 1/sqrt(fan_in)) for weight and bias.
    Weights stored transposed as (in, out) f32; biases as (1, out) f32."""
    sizes = [(state_size, fc1_size), (fc1_size, fc2_size),
             (fc2_size, fc3_size), (fc3_size, action_size)]
    params = {}
    for i, (fan_in, fan_out) in enumerate(sizes, start=1):
        key, kw, kb = jax.random.split(key, 3)
        bound = 1.0 / jnp.sqrt(jnp.float32(fan_in))
        params[f"w{i}"] = jax.random.uniform(
            kw, (fan_in, fan_out), jnp.float32, minval=-bound, maxval=bound)
        params[f"b{i}"] = jax.random.uniform(
            kb, (1, fan_out), jnp.float32, minval=-bound, maxval=bound)
    return params


def _pad2(a, rows, cols, dtype):
    out = jnp.zeros((rows, cols), dtype)
    return out.at[:a.shape[0], :a.shape[1]].set(a.astype(dtype))


def pad_and_cast_params(params):
    """Zero-pad every feature dim up to a multiple of 128; weights -> bf16
    (fed to the MXU), biases -> f32 (added to the f32 accumulator).
    Zero padding on BOTH the activation columns and the matching weight rows
    keeps the math identical to the unpadded network."""
    padded = {}
    for i in range(1, 5):
        w = params[f"w{i}"]
        b = params[f"b{i}"]
        kp = _round_up(w.shape[0], 128)
        np_ = _round_up(w.shape[1], 128)
        padded[f"w{i}"] = _pad2(w, kp, np_, jnp.bfloat16)
        padded[f"b{i}"] = _pad2(b, 1, np_, jnp.float32)
    return padded


def actor_net_reference_f32(x, params):
    """Pure-JAX f32 reference of the PyTorch forward."""
    h = jnp.maximum(x @ params["w1"] + params["b1"], 0.0)
    h = jnp.maximum(h @ params["w2"] + params["b2"], 0.0)
    h = jnp.maximum(h @ params["w3"] + params["b3"], 0.0)
    return jnp.tanh(h @ params["w4"] + params["b4"])


def actor_net_reference_bf16(x, padded_params, state_size, action_size):
    """Pure-JAX reference that mirrors the kernel's bf16/f32 mixed precision."""
    s_pad = padded_params["w1"].shape[0]
    xp = jnp.zeros((x.shape[0], s_pad), jnp.bfloat16)
    xp = xp.at[:, :state_size].set(x.astype(jnp.bfloat16))
    h = xp
    for i in range(1, 4):
        h = jnp.dot(h, padded_params[f"w{i}"],
                    preferred_element_type=jnp.float32) + padded_params[f"b{i}"]
        h = jnp.maximum(h, 0.0).astype(jnp.bfloat16)
    y = jnp.dot(h, padded_params["w4"],
                preferred_element_type=jnp.float32) + padded_params["b4"]
    return jnp.tanh(y)[:, :action_size]


if __name__ == "__main__":
    key = jax.random.PRNGKey(0)
    key, k_x, k_p = jax.random.split(key, 3)

    batch = 8
    state_size, action_size = 212, 39

    params_f32 = init_actor_params(k_p, state_size=state_size,
                                   action_size=action_size)
    padded_params = pad_and_cast_params(params_f32)
    x = jax.random.normal(k_x, (batch, state_size), dtype=jnp.float32)

    out = actor_net_forward(x, padded_params, action_size=action_size)
    out = jax.block_until_ready(out)
    assert out.shape == (batch, action_size)

    # Exact-precision-matched reference (same bf16 weights, f32 accumulation).
    ref_bf16 = actor_net_reference_bf16(x, padded_params, state_size, action_size)
    assert jnp.allclose(out, ref_bf16, atol=1e-2, rtol=1e-2), (
        float(jnp.max(jnp.abs(out - ref_bf16))))

    # Informational: distance from the pure-f32 network (bf16 weight rounding).
    ref_f32 = actor_net_reference_f32(x, params_f32)
    _ = float(jnp.max(jnp.abs(out - ref_f32)))

    print("KERNEL_OK")
</pallas_src>

<mosaic_0001>
module attributes {stable_mosaic.version = 11 : i64} {
  func.func @actor_kernel(%arg0: i32, %arg1: memref<8x256xbf16, #tpu.memory_space<vmem>>, %arg2: memref<256x512xbf16, #tpu.memory_space<vmem>>, %arg3: memref<1x512xf32, #tpu.memory_space<vmem>>, %arg4: memref<512x384xbf16, #tpu.memory_space<vmem>>, %arg5: memref<1x384xf32, #tpu.memory_space<vmem>>, %arg6: memref<384x128xbf16, #tpu.memory_space<vmem>>, %arg7: memref<1x128xf32, #tpu.memory_space<vmem>>, %arg8: memref<128x128xbf16, #tpu.memory_space<vmem>>, %arg9: memref<1x128xf32, #tpu.memory_space<vmem>>, %arg10: memref<8x128xf32, #tpu.memory_space<vmem>>) attributes {dimension_semantics = [#tpu.dimension_semantics<parallel>], iteration_bounds = array<i64: 1>, scalar_prefetch = 0 : i64, scratch_operands = 0 : i64, tpu.core_type = #tpu.core_type<tc>, window_params = [{transform_indices = @transform_0, window_bounds = array<i64: 8, 256>}, {pipeline_mode = #tpu.pipeline_mode<synchronous>, transform_indices = @transform_1, window_bounds = array<i64: 256, 512>}, {pipeline_mode = #tpu.pipeline_mode<synchronous>, transform_indices = @transform_2, window_bounds = array<i64: 1, 512>}, {pipeline_mode = #tpu.pipeline_mode<synchronous>, transform_indices = @transform_3, window_bounds = array<i64: 512, 384>}, {pipeline_mode = #tpu.pipeline_mode<synchronous>, transform_indices = @transform_4, window_bounds = array<i64: 1, 384>}, {pipeline_mode = #tpu.pipeline_mode<synchronous>, transform_indices = @transform_5, window_bounds = array<i64: 384, 128>}, {pipeline_mode = #tpu.pipeline_mode<synchronous>, transform_indices = @transform_6, window_bounds = array<i64: 1, 128>}, {pipeline_mode = #tpu.pipeline_mode<synchronous>, transform_indices = @transform_7, window_bounds = array<i64: 128, 128>}, {pipeline_mode = #tpu.pipeline_mode<synchronous>, transform_indices = @transform_8, window_bounds = array<i64: 1, 128>}, {transform_indices = @transform_9, window_bounds = array<i64: 8, 128>}]} {
    %c0 = arith.constant 0 : index
    %c0_0 = arith.constant 0 : index
    %0 = vector.load %arg1[%c0, %c0_0] : memref<8x256xbf16, #tpu.memory_space<vmem>>, vector<8x256xbf16>
    %c0_1 = arith.constant 0 : index
    %c0_2 = arith.constant 0 : index
    %1 = vector.load %arg2[%c0_1, %c0_2] : memref<256x512xbf16, #tpu.memory_space<vmem>>, vector<256x512xbf16>
    %cst = arith.constant dense<0.000000e+00> : vector<8x512xf32>
    %2 = tpu.matmul %0, %1, %cst {dimension_numbers = #tpu.dot_dimension_numbers<[1], [0], [0], [1], [0, 0, 1, 1], [], []>} : vector<8x256xbf16>, vector<256x512xbf16>, vector<8x512xf32> -> vector<8x512xf32>
    %c0_3 = arith.constant 0 : index
    %c0_4 = arith.constant 0 : index
    %3 = vector.load %arg3[%c0_3, %c0_4] : memref<1x512xf32, #tpu.memory_space<vmem>>, vector<1x512xf32>
    %4 = vector.broadcast %3 : vector<1x512xf32> to vector<8x512xf32>
    %5 = arith.addf %2, %4 : vector<8x512xf32>
    %cst_5 = arith.constant 0.000000e+00 : f32
    %6 = vector.broadcast %cst_5 : f32 to vector<8x512xf32>
    %7 = arith.maximumf %5, %6 : vector<8x512xf32>
    %8 = arith.truncf %7 : vector<8x512xf32> to vector<8x512xbf16>
    %c0_6 = arith.constant 0 : index
    %c0_7 = arith.constant 0 : index
    %9 = vector.load %arg4[%c0_6, %c0_7] : memref<512x384xbf16, #tpu.memory_space<vmem>>, vector<512x384xbf16>
    %cst_8 = arith.constant dense<0.000000e+00> : vector<8x384xf32>
    %10 = tpu.matmul %8, %9, %cst_8 {dimension_numbers = #tpu.dot_dimension_numbers<[1], [0], [0], [1], [0, 0, 1, 1], [], []>} : vector<8x512xbf16>, vector<512x384xbf16>, vector<8x384xf32> -> vector<8x384xf32>
    %c0_9 = arith.constant 0 : index
    %c0_10 = arith.constant 0 : index
    %11 = vector.load %arg5[%c0_9, %c0_10] : memref<1x384xf32, #tpu.memory_space<vmem>>, vector<1x384xf32>
    %12 = vector.broadcast %11 : vector<1x384xf32> to vector<8x384xf32>
    %13 = arith.addf %10, %12 : vector<8x384xf32>
    %cst_11 = arith.constant 0.000000e+00 : f32
    %14 = vector.broadcast %cst_11 : f32 to vector<8x384xf32>
    %15 = arith.maximumf %13, %14 : vector<8x384xf32>
    %16 = arith.truncf %15 : vector<8x384xf32> to vector<8x384xbf16>
    %c0_12 = arith.constant 0 : index
    %c0_13 = arith.constant 0 : index
    %17 = vector.load %arg6[%c0_12, %c0_13] : memref<384x128xbf16, #tpu.memory_space<vmem>>, vector<384x128xbf16>
    %cst_14 = arith.constant dense<0.000000e+00> : vector<8x128xf32>
    %18 = tpu.matmul %16, %17, %cst_14 {dimension_numbers = #tpu.dot_dimension_numbers<[1], [0], [0], [1], [0, 0, 1, 1], [], []>} : vector<8x384xbf16>, vector<384x128xbf16>, vector<8x128xf32> -> vector<8x128xf32>
    %c0_15 = arith.constant 0 : index
    %c0_16 = arith.constant 0 : index
    %19 = vector.load %arg7[%c0_15, %c0_16] : memref<1x128xf32, #tpu.memory_space<vmem>>, vector<1x128xf32>
    %20 = vector.broadcast %19 : vector<1x128xf32> to vector<8x128xf32>
    %21 = arith.addf %18, %20 : vector<8x128xf32>
    %cst_17 = arith.constant 0.000000e+00 : f32
    %22 = vector.broadcast %cst_17 : f32 to vector<8x128xf32>
    %23 = arith.maximumf %21, %22 : vector<8x128xf32>
    %24 = arith.truncf %23 : vector<8x128xf32> to vector<8x128xbf16>
    %c0_18 = arith.constant 0 : index
    %c0_19 = arith.constant 0 : index
    %25 = vector.load %arg8[%c0_18, %c0_19] : memref<128x128xbf16, #tpu.memory_space<vmem>>, vector<128x128xbf16>
    %cst_20 = arith.constant dense<0.000000e+00> : vector<8x128xf32>
    %26 = tpu.matmul %24, %25, %cst_20 {dimension_numbers = #tpu.dot_dimension_numbers<[1], [0], [0], [1], [0, 0, 1, 1], [], []>} : vector<8x128xbf16>, vector<128x128xbf16>, vector<8x128xf32> -> vector<8x128xf32>
    %c0_21 = arith.constant 0 : index
    %c0_22 = arith.constant 0 : index
    %27 = vector.load %arg9[%c0_21, %c0_22] : memref<1x128xf32, #tpu.memory_space<vmem>>, vector<1x128xf32>
    %28 = vector.broadcast %27 : vector<1x128xf32> to vector<8x128xf32>
    %29 = arith.addf %26, %28 : vector<8x128xf32>
    %30 = math.tanh %29 : vector<8x128xf32>
    %c0_23 = arith.constant 0 : index
    %c0_24 = arith.constant 0 : index
    %31 = vector.load %arg10[%c0_23, %c0_24] : memref<8x128xf32, #tpu.memory_space<vmem>>, vector<8x128xf32>
    tpu.vector_store %arg10[%c0_23, %c0_24], %30 {strides = array<i32>} : memref<8x128xf32, #tpu.memory_space<vmem>>, vector<8x128xf32>,
    return
  }
  func.func @transform_0(%arg0: i32) -> (i32, i32) {
    %c0_i32 = arith.constant 0 : i32
    %c0_i32_0 = arith.constant 0 : i32
    return %arg0, %c0_i32 : i32, i32
  }
  func.func @transform_1(%arg0: i32) -> (i32, i32) {
    %c0_i32 = arith.constant 0 : i32
    %c0_i32_0 = arith.constant 0 : i32
    %c0_i32_1 = arith.constant 0 : i32
    return %c0_i32, %c0_i32_0 : i32, i32
  }
  func.func @transform_2(%arg0: i32) -> (i32, i32) {
    %c0_i32 = arith.constant 0 : i32
    %c0_i32_0 = arith.constant 0 : i32
    %c0_i32_1 = arith.constant 0 : i32
    return %c0_i32, %c0_i32_0 : i32, i32
  }
  func.func @transform_3(%arg0: i32) -> (i32, i32) {
    %c0_i32 = arith.constant 0 : i32
    %c0_i32_0 = arith.constant 0 : i32
    %c0_i32_1 = arith.constant 0 : i32
    return %c0_i32, %c0_i32_0 : i32, i32
  }
  func.func @transform_4(%arg0: i32) -> (i32, i32) {
    %c0_i32 = arith.constant 0 : i32
    %c0_i32_0 = arith.constant 0 : i32
    %c0_i32_1 = arith.constant 0 : i32
    return %c0_i32, %c0_i32_0 : i32, i32
  }
  func.func @transform_5(%arg0: i32) -> (i32, i32) {
    %c0_i32 = arith.constant 0 : i32
    %c0_i32_0 = arith.constant 0 : i32
    %c0_i32_1 = arith.constant 0 : i32
    return %c0_i32, %c0_i32_0 : i32, i32
  }
  func.func @transform_6(%arg0: i32) -> (i32, i32) {
    %c0_i32 = arith.constant 0 : i32
    %c0_i32_0 = arith.constant 0 : i32
    %c0_i32_1 = arith.constant 0 : i32
    return %c0_i32, %c0_i32_0 : i32, i32
  }
  func.func @transform_7(%arg0: i32) -> (i32, i32) {
    %c0_i32 = arith.constant 0 : i32
    %c0_i32_0 = arith.constant 0 : i32
    %c0_i32_1 = arith.constant 0 : i32
    return %c0_i32, %c0_i32_0 : i32, i32
  }
  func.func @transform_8(%arg0: i32) -> (i32, i32) {
    %c0_i32 = arith.constant 0 : i32
    %c0_i32_0 = arith.constant 0 : i32
    %c0_i32_1 = arith.constant 0 : i32
    return %c0_i32, %c0_i32_0 : i32, i32
  }
  func.func @transform_9(%arg0: i32) -> (i32, i32) {
    %c0_i32 = arith.constant 0 : i32
    %c0_i32_0 = arith.constant 0 : i32
    return %arg0, %c0_i32 : i32, i32
  }
}

</mosaic_0001>

<llo_original>
// kernel: tpu_custom_call.1
$region0: #{tpu_custom_call.1}
  #allocation0 [shape = 'u32[]', space=smem, size = 0x4, offset = 0x4, fixed_abs, tag = 'smem constant byte address 0x4 - core index']
  #allocation1 [shape = 'u32[72,128]{1,0:T(1,128)}', space=vmem, size = 0x9000, scoped, tag = 'internal scratch']
  %s0 = inlined_call_operand.hbm [shape: bf16[8,256], index: 0, kind: input, shape index: {}]
  %s1 = inlined_call_operand.hbm [shape: bf16[256,512], index: 1, kind: input, shape index: {}]
  %s2 = inlined_call_operand.hbm [shape: f32[1,512], index: 2, kind: input, shape index: {}]
  %s3 = inlined_call_operand.hbm [shape: bf16[512,384], index: 3, kind: input, shape index: {}]
  %s4 = inlined_call_operand.vmem [shape: f32[1,384], index: 4, kind: input, shape index: {}]
  %s5 = inlined_call_operand.hbm [shape: bf16[384,128], index: 5, kind: input, shape index: {}]
  %s6 = inlined_call_operand.vmem [shape: f32[1,128], index: 6, kind: input, shape index: {}]
  %s7 = inlined_call_operand.hbm [shape: bf16[128,128], index: 7, kind: input, shape index: {}]
  %s8 = inlined_call_operand.vmem [shape: f32[1,128], index: 8, kind: input, shape index: {}]
  %s9 = inlined_call_operand.hbm [shape: f32[8,128], index: 9, kind: output, shape index: {}]
  %s10 = sld [smem:[#allocation0]]
  $region70: #{tpu_custom_call.1} parent=0
    _
  %s12 = ssub.s32 1, %s10
  %s13 = scalar_select 0, %s12, %s10
  $region1: #{tpu_custom_call.1} parent=0
    #allocation2 [shape = 'u8[4096]{0}', space=vmem, size = 0x1000, scoped, tag = 'input window, operand 0, single buffered']
    #allocation3 [shape = 's32[1]{0}', space=sflag, size = 0x4, scoped, tag = 'scoped memory for tpu_custom_call.1']
    #allocation4 [shape = 's32[1]{0}', space=sflag, size = 0x4, scoped, tag = 'scoped memory for tpu_custom_call.1']
    #allocation5 [shape = 'u8[262144]{0}', space=vmem, size = 0x40000, scoped, tag = 'input window, operand 1, single buffered']
    #allocation6 [shape = 's32[1]{0}', space=sflag, size = 0x4, scoped, tag = 'scoped memory for tpu_custom_call.1']
    #allocation7 [shape = 'u8[2048]{0}', space=vmem, size = 0x800, scoped, tag = 'input window, operand 2, single buffered']
    #allocation8 [shape = 'u8[393216]{0}', space=vmem, size = 0x60000, scoped, tag = 'input window, operand 3, single buffered']
    #allocation9 [shape = 's32[1]{0}', space=sflag, size = 0x4, scoped, tag = 'scoped memory for tpu_custom_call.1']
    #allocation10 [shape = 'u8[98304]{0}', space=vmem, size = 0x18000, scoped, tag = 'input window, operand 5, single buffered']
    #allocation11 [shape = 'u8[32768]{0}', space=vmem, size = 0x8000, scoped, tag = 'input window, operand 7, single buffered']
    #allocation12 [shape = 's32[1]{0}', space=sflag, size = 0x4, scoped, tag = 'scoped memory for tpu_custom_call.1']
    #allocation13 [shape = 'u8[4096]{0}', space=vmem, size = 0x1000, scoped, tag = 'output window, operand 0, single buffered']
    %14 = vsyncpa [#allocation3], 0
    %15 = vsyncpa [#allocation6], 0
    %16 = vsyncpa [#allocation9], 0
    %17 = vsyncpa [#allocation12], 0
    %18 = vsyncpa [#allocation4], 0
    // Predicated region
    $region2: #{tpu_custom_call.1} parent=1 // pred_check
      _
    $region3: #{tpu_custom_call.1} parent=1 // pred_check_branch
      %20 = sbr.rel (0) target = $region5
    $region4: #{tpu_custom_call.1} parent=1 // pred_region
      %22 = vsyncadd [#allocation3], 0
      %s24 = sshll.u32 %s0, 4
      %s25 = int_to_ptr.hbm [resolvable:$true] %s24
      %s26 = sshll.u32 [#allocation2], 4
      %s27 = int_to_ptr.vmem [resolvable:$true] %s26
      %29 = dma.hbm_to_vmem [thread:$0]  %s25, 128, %s27, [#allocation3]
    $region5: #{tpu_custom_call.1} parent=1 // pred_fallthru
      _
    // Predicated region
    $region6: #{tpu_custom_call.1} parent=1 // pred_check
      _
    $region7: #{tpu_custom_call.1} parent=1 // pred_check_branch
      %31 = sbr.rel (0) target = $region9
    $region8: #{tpu_custom_call.1} parent=1 // pred_region
      %33 = vsyncadd [#allocation6], 0
      %s34 = sshll.u32 %s1, 4
      %s35 = int_to_ptr.hbm [resolvable:$true] %s34
      %s36 = sshll.u32 [#allocation5], 4
      %s37 = int_to_ptr.vmem [resolvable:$true] %s36
      %42 = dma.hbm_to_vmem [thread:$0]  %s35, 8192, %s37, [#allocation6], 256, 256, 16
    $region9: #{tpu_custom_call.1} parent=1 // pred_fallthru
      _
    // Predicated region
    $region10: #{tpu_custom_call.1} parent=1 // pred_check
      _
    $region11: #{tpu_custom_call.1} parent=1 // pred_check_branch
      %44 = sbr.rel (0) target = $region13
    $region12: #{tpu_custom_call.1} parent=1 // pred_region
      %46 = vsyncadd [#allocation6], 0
      %s48 = sshll.u32 %s2, 4
      %s49 = int_to_ptr.hbm [resolvable:$true] %s48
      %s50 = sshll.u32 [#allocation7], 4
      %s51 = int_to_ptr.vmem [resolvable:$true] %s50
      %53 = dma.hbm_to_vmem [thread:$0]  %s49, 64, %s51, [#allocation6]
    $region13: #{tpu_custom_call.1} parent=1 // pred_fallthru
      _
    // Predicated region
    $region14: #{tpu_custom_call.1} parent=1 // pred_check
      _
    $region15: #{tpu_custom_call.1} parent=1 // pred_check_branch
      %55 = sbr.rel (0) target = $region17
    $region16: #{tpu_custom_call.1} parent=1 // pred_region
      %57 = vsyncadd [#allocation9], 0
      %s58 = sshll.u32 %s3, 4
      %s59 = int_to_ptr.hbm [resolvable:$true] %s58
      %s60 = sshll.u32 [#allocation8], 4
      %s61 = int_to_ptr.vmem [resolvable:$true] %s60
      %66 = dma.hbm_to_vmem [thread:$0]  %s59, 12288, %s61, [#allocation9], 192, 192, 12
    $region17: #{tpu_custom_call.1} parent=1 // pred_fallthru
      _
    // Predicated region
    $region18: #{tpu_custom_call.1} parent=1 // pred_check
      _
    $region19: #{tpu_custom_call.1} parent=1 // pred_check_branch
      %68 = sbr.rel (0) target = $region21
    $region20: #{tpu_custom_call.1} parent=1 // pred_region
      _
    $region21: #{tpu_custom_call.1} parent=1 // pred_fallthru
      _
    // Predicated region
    $region22: #{tpu_custom_call.1} parent=1 // pred_check
      _
    $region23: #{tpu_custom_call.1} parent=1 // pred_check_branch
      %70 = sbr.rel (0) target = $region25
    $region24: #{tpu_custom_call.1} parent=1 // pred_region
      %72 = vsyncadd [#allocation9], 0
      %s73 = sshll.u32 %s5, 4
      %s74 = int_to_ptr.hbm [resolvable:$true] %s73
      %s75 = sshll.u32 [#allocation10], 4
      %s76 = int_to_ptr.vmem [resolvable:$true] %s75
      %81 = dma.hbm_to_vmem [thread:$0]  %s74, 3072, %s76, [#allocation9], 64, 64, 4
    $region25: #{tpu_custom_call.1} parent=1 // pred_fallthru
      _
    // Predicated region
    $region26: #{tpu_custom_call.1} parent=1 // pred_check
      _
    $region27: #{tpu_custom_call.1} parent=1 // pred_check_branch
      %83 = sbr.rel (0) target = $region29
    $region28: #{tpu_custom_call.1} parent=1 // pred_region
      _
    $region29: #{tpu_custom_call.1} parent=1 // pred_fallthru
      _
    // Predicated region
    $region30: #{tpu_custom_call.1} parent=1 // pred_check
      _
    $region31: #{tpu_custom_call.1} parent=1 // pred_check_branch
      %85 = sbr.rel (0) target = $region33
    $region32: #{tpu_custom_call.1} parent=1 // pred_region
      %87 = vsyncadd [#allocation12], 0
      %s88 = sshll.u32 %s7, 4
      %s89 = int_to_ptr.hbm [resolvable:$true] %s88
      %s90 = sshll.u32 [#allocation11], 4
      %s91 = int_to_ptr.vmem [resolvable:$true] %s90
      %96 = dma.hbm_to_vmem [thread:$0]  %s89, 1024, %s91, [#allocation12], 64, 64, 4
    $region33: #{tpu_custom_call.1} parent=1 // pred_fallthru
      _
    // Predicated region
    $region34: #{tpu_custom_call.1} parent=1 // pred_check
      _
    $region35: #{tpu_custom_call.1} parent=1 // pred_check_branch
      %98 = sbr.rel (0) target = $region37
    $region36: #{tpu_custom_call.1} parent=1 // pred_region
      _
    $region37: #{tpu_custom_call.1} parent=1 // pred_fallthru
      _
    // Predicated region
    $region38: #{tpu_custom_call.1} parent=1 // pred_check
      _
    $region39: #{tpu_custom_call.1} parent=1 // pred_check_branch
      %100 = sbr.rel (0) target = $region41
    $region40: #{tpu_custom_call.1} parent=1 // pred_region
      %102 = dma.done [#allocation3], 128
    $region41: #{tpu_custom_call.1} parent=1 // pred_fallthru
      _
    // Predicated region
    $region42: #{tpu_custom_call.1} parent=1 // pred_check
      _
    $region43: #{tpu_custom_call.1} parent=1 // pred_check_branch
      %104 = sbr.rel (0) target = $region45
    $region44: #{tpu_custom_call.1} parent=1 // pred_region
      %106 = dma.done [#allocation6], 8192
    $region45: #{tpu_custom_call.1} parent=1 // pred_fallthru
      _
    // Predicated region
    $region46: #{tpu_custom_call.1} parent=1 // pred_check
      _
    $region47: #{tpu_custom_call.1} parent=1 // pred_check_branch
      %108 = sbr.rel (0) target = $region49
    $region48: #{tpu_custom_call.1} parent=1 // pred_region
      %110 = dma.done [#allocation6], 64
    $region49: #{tpu_custom_call.1} parent=1 // pred_fallthru
      _
    // Predicated region
    $region50: #{tpu_custom_call.1} parent=1 // pred_check
      _
    $region51: #{tpu_custom_call.1} parent=1 // pred_check_branch
      %112 = sbr.rel (0) target = $region53
    $region52: #{tpu_custom_call.1} parent=1 // pred_region
      %114 = dma.done [#allocation9], 12288
    $region53: #{tpu_custom_call.1} parent=1 // pred_fallthru
      _
    // Predicated region
    $region54: #{tpu_custom_call.1} parent=1 // pred_check
      _
    $region55: #{tpu_custom_call.1} parent=1 // pred_check_branch
      %116 = sbr.rel (0) target = $region57
    $region56: #{tpu_custom_call.1} parent=1 // pred_region
      %118 = dma.done [#allocation9], 3072
    $region57: #{tpu_custom_call.1} parent=1 // pred_fallthru
      _
    // Predicated region
    $region58: #{tpu_custom_call.1} parent=1 // pred_check
      _
    $region59: #{tpu_custom_call.1} parent=1 // pred_check_branch
      %120 = sbr.rel (0) target = $region61
    $region60: #{tpu_custom_call.1} parent=1 // pred_region
      %122 = dma.done [#allocation12], 1024
    $region61: #{tpu_custom_call.1} parent=1 // pred_fallthru
      _
    %v123 = vld [vmem:[#allocation2] sm:$0xff]
    %v124 = vld [vmem:[#allocation5] sm:$0xff]
    %v125 = vld [vmem:[#allocation5 + $0x8] sm:$0xff]
    %v126 = vld [vmem:[#allocation5 + $0x10] sm:$0xff]
    %v127 = vld [vmem:[#allocation5 + $0x18] sm:$0xff]
    %v128 = vld [vmem:[#allocation5 + $0x20] sm:$0xff]
    %v129 = vld [vmem:[#allocation5 + $0x28] sm:$0xff]
    %v130 = vld [vmem:[#allocation5 + $0x30] sm:$0xff]
    %v131 = vld [vmem:[#allocation5 + $0x38] sm:$0xff]
    %v132 = vld [vmem:[#allocation5 + $0x40] sm:$0xff]
    %v133 = vld [vmem:[#allocation5 + $0x48] sm:$0xff]
    %v134 = vld [vmem:[#allocation5 + $0x50] sm:$0xff]
    %v135 = vld [vmem:[#allocation5 + $0x58] sm:$0xff]
    %v136 = vld [vmem:[#allocation5 + $0x60] sm:$0xff]
    %v137 = vld [vmem:[#allocation5 + $0x68] sm:$0xff]
    %v138 = vld [vmem:[#allocation5 + $0x70] sm:$0xff]
    %v139 = vld [vmem:[#allocation5 + $0x78] sm:$0xff]
    %v140 = vld [vmem:[#allocation5 + $0x80] sm:$0xff]
    %v141 = vld [vmem:[#allocation5 + $0x88] sm:$0xff]
    %v142 = vld [vmem:[#allocation5 + $0x90] sm:$0xff]
    %v143 = vld [vmem:[#allocation5 + $0x98] sm:$0xff]
    %v144 = vld [vmem:[#allocation5 + $0xa0] sm:$0xff]
    %v145 = vld [vmem:[#allocation5 + $0xa8] sm:$0xff]
    %v146 = vld [vmem:[#allocation5 + $0xb0] sm:$0xff]
    %v147 = vld [vmem:[#allocation5 + $0xb8] sm:$0xff]
    %v148 = vld [vmem:[#allocation5 + $0xc0] sm:$0xff]
    %v149 = vld [vmem:[#allocation5 + $0xc8] sm:$0xff]
    %v150 = vld [vmem:[#allocation5 + $0xd0] sm:$0xff]
    %v151 = vld [vmem:[#allocation5 + $0xd8] sm:$0xff]
    %v152 = vld [vmem:[#allocation5 + $0xe0] sm:$0xff]
    %v153 = vld [vmem:[#allocation5 + $0xe8] sm:$0xff]
    %v154 = vld [vmem:[#allocation5 + $0xf0] sm:$0xff]
    %v155 = vld [vmem:[#allocation5 + $0xf8] sm:$0xff]
    %v156 = vld [vmem:[#allocation5 + $0x100] sm:$0xff]
    %v157 = vld [vmem:[#allocation5 + $0x108] sm:$0xff]
    %v158 = vld [vmem:[#allocation5 + $0x110] sm:$0xff]
    %v159 = vld [vmem:[#allocation5 + $0x118] sm:$0xff]
    %v160 = vld [vmem:[#allocation5 + $0x120] sm:$0xff]
    %v161 = vld [vmem:[#allocation5 + $0x128] sm:$0xff]
    %v162 = vld [vmem:[#allocation5 + $0x130] sm:$0xff]
    %v163 = vld [vmem:[#allocation5 + $0x138] sm:$0xff]
    %v164 = vld [vmem:[#allocation5 + $0x140] sm:$0xff]
    %v165 = vld [vmem:[#allocation5 + $0x148] sm:$0xff]
    %v166 = vld [vmem:[#allocation5 + $0x150] sm:$0xff]
    %v167 = vld [vmem:[#allocation5 + $0x158] sm:$0xff]
    %v168 = vld [vmem:[#allocation5 + $0x160] sm:$0xff]
    %v169 = vld [vmem:[#allocation5 + $0x168] sm:$0xff]
    %v170 = vld [vmem:[#allocation5 + $0x170] sm:$0xff]
    %v171 = vld [vmem:[#allocation5 + $0x178] sm:$0xff]
    %v172 = vld [vmem:[#allocation5 + $0x180] sm:$0xff]
    %v173 = vld [vmem:[#allocation5 + $0x188] sm:$0xff]
    %v174 = vld [vmem:[#allocation5 + $0x190] sm:$0xff]
    %v175 = vld [vmem:[#allocation5 + $0x198] sm:$0xff]
    %v176 = vld [vmem:[#allocation5 + $0x1a0] sm:$0xff]
    %v177 = vld [vmem:[#allocation5 + $0x1a8] sm:$0xff]
    %v178 = vld [vmem:[#allocation5 + $0x1b0] sm:$0xff]
    %v179 = vld [vmem:[#allocation5 + $0x1b8] sm:$0xff]
    %v180 = vld [vmem:[#allocation5 + $0x1c0] sm:$0xff]
    %v181 = vld [vmem:[#allocation5 + $0x1c8] sm:$0xff]
    %v182 = vld [vmem:[#allocation5 + $0x1d0] sm:$0xff]
    %v183 = vld [vmem:[#allocation5 + $0x1d8] sm:$0xff]
    %v184 = vld [vmem:[#allocation5 + $0x1e0] sm:$0xff]
    %v185 = vld [vmem:[#allocation5 + $0x1e8] sm:$0xff]
    %v186 = vld [vmem:[#allocation5 + $0x1f0] sm:$0xff]
    %v187 = vld [vmem:[#allocation5 + $0x1f8] sm:$0xff]
    %v188 = vld [vmem:[#allocation7] sm:$0xf]
    %v190 = vperm.slane %v188, 0
    %v191 = vperm.slane %v188, 1
    %v192 = vperm.slane %v188, 2
    %v193 = vperm.slane %v188, 3
    %v199 = vunpack.c.l.b16 %v123
    %v200 = vunpack.c.h.b16 %v123
    %v201 = vpack.c.b16 %v199, %v199
    %v202 = vpack.c.b16 %v200, %v200
    %v269 = vunpack.c.l.b16 %v124
    %v270 = vunpack.c.h.b16 %v124
    %v271 = vunpack.c.l.b16 %v125
    %v272 = vunpack.c.h.b16 %v125
    %v273 = vunpack.c.l.b16 %v126
    %v274 = vunpack.c.h.b16 %v126
    %v275 = vunpack.c.l.b16 %v127
    %v276 = vunpack.c.h.b16 %v127
    %v277 = vunpack.c.l.b16 %v128
    %v278 = vunpack.c.h.b16 %v128
    %v279 = vunpack.c.l.b16 %v129
    %v280 = vunpack.c.h.b16 %v129
    %v281 = vunpack.c.l.b16 %v130
    %v282 = vunpack.c.h.b16 %v130
    %v283 = vunpack.c.l.b16 %v131
    %v284 = vunpack.c.h.b16 %v131
    %v285 = vunpack.c.l.b16 %v132
    %v286 = vunpack.c.h.b16 %v132
    %v287 = vunpack.c.l.b16 %v133
    %v288 = vunpack.c.h.b16 %v133
    %v289 = vunpack.c.l.b16 %v134
    %v290 = vunpack.c.h.b16 %v134
    %v291 = vunpack.c.l.b16 %v135
    %v292 = vunpack.c.h.b16 %v135
    %v293 = vunpack.c.l.b16 %v136
    %v294 = vunpack.c.h.b16 %v136
    %v295 = vunpack.c.l.b16 %v137
    %v296 = vunpack.c.h.b16 %v137
    %v297 = vunpack.c.l.b16 %v138
    %v298 = vunpack.c.h.b16 %v138
    %v299 = vunpack.c.l.b16 %v139
    %v300 = vunpack.c.h.b16 %v139
    %v301 = vunpack.c.l.b16 %v140
    %v302 = vunpack.c.h.b16 %v140
    %v303 = vunpack.c.l.b16 %v141
    %v304 = vunpack.c.h.b16 %v141
    %v305 = vunpack.c.l.b16 %v142
    %v306 = vunpack.c.h.b16 %v142
    %v307 = vunpack.c.l.b16 %v143
    %v308 = vunpack.c.h.b16 %v143
    %v309 = vunpack.c.l.b16 %v144
    %v310 = vunpack.c.h.b16 %v144
    %v311 = vunpack.c.l.b16 %v145
    %v312 = vunpack.c.h.b16 %v145
    %v313 = vunpack.c.l.b16 %v146
    %v314 = vunpack.c.h.b16 %v146
    %v315 = vunpack.c.l.b16 %v147
    %v316 = vunpack.c.h.b16 %v147
    %v317 = vunpack.c.l.b16 %v148
    %v318 = vunpack.c.h.b16 %v148
    %v319 = vunpack.c.l.b16 %v149
    %v320 = vunpack.c.h.b16 %v149
    %v321 = vunpack.c.l.b16 %v150
    %v322 = vunpack.c.h.b16 %v150
    %v323 = vunpack.c.l.b16 %v151
    %v324 = vunpack.c.h.b16 %v151
    %v325 = vunpack.c.l.b16 %v152
    %v326 = vunpack.c.h.b16 %v152
    %v327 = vunpack.c.l.b16 %v153
    %v328 = vunpack.c.h.b16 %v153
    %v329 = vunpack.c.l.b16 %v154
    %v330 = vunpack.c.h.b16 %v154
    %v331 = vunpack.c.l.b16 %v155
    %v332 = vunpack.c.h.b16 %v155
    %v333 = vunpack.c.l.b16 %v156
    %v334 = vunpack.c.h.b16 %v156
    %v335 = vunpack.c.l.b16 %v157
    %v336 = vunpack.c.h.b16 %v157
    %v337 = vunpack.c.l.b16 %v158
    %v338 = vunpack.c.h.b16 %v158
    %v339 = vunpack.c.l.b16 %v159
    %v340 = vunpack.c.h.b16 %v159
    %v341 = vunpack.c.l.b16 %v160
    %v342 = vunpack.c.h.b16 %v160
    %v343 = vunpack.c.l.b16 %v161
    %v344 = vunpack.c.h.b16 %v161
    %v345 = vunpack.c.l.b16 %v162
    %v346 = vunpack.c.h.b16 %v162
    %v347 = vunpack.c.l.b16 %v163
    %v348 = vunpack.c.h.b16 %v163
    %v349 = vunpack.c.l.b16 %v164
    %v350 = vunpack.c.h.b16 %v164
    %v351 = vunpack.c.l.b16 %v165
    %v352 = vunpack.c.h.b16 %v165
    %v353 = vunpack.c.l.b16 %v166
    %v354 = vunpack.c.h.b16 %v166
    %v355 = vunpack.c.l.b16 %v167
    %v356 = vunpack.c.h.b16 %v167
    %v357 = vunpack.c.l.b16 %v168
    %v358 = vunpack.c.h.b16 %v168
    %v359 = vunpack.c.l.b16 %v169
    %v360 = vunpack.c.h.b16 %v169
    %v361 = vunpack.c.l.b16 %v170
    %v362 = vunpack.c.h.b16 %v170
    %v363 = vunpack.c.l.b16 %v171
    %v364 = vunpack.c.h.b16 %v171
    %v365 = vunpack.c.l.b16 %v172
    %v366 = vunpack.c.h.b16 %v172
    %v367 = vunpack.c.l.b16 %v173
    %v368 = vunpack.c.h.b16 %v173
    %v369 = vunpack.c.l.b16 %v174
    %v370 = vunpack.c.h.b16 %v174
    %v371 = vunpack.c.l.b16 %v175
    %v372 = vunpack.c.h.b16 %v175
    %v373 = vunpack.c.l.b16 %v176
    %v374 = vunpack.c.h.b16 %v176
    %v375 = vunpack.c.l.b16 %v177
    %v376 = vunpack.c.h.b16 %v177
    %v377 = vunpack.c.l.b16 %v178
    %v378 = vunpack.c.h.b16 %v178
    %v379 = vunpack.c.l.b16 %v179
    %v380 = vunpack.c.h.b16 %v179
    %v381 = vunpack.c.l.b16 %v180
    %v382 = vunpack.c.h.b16 %v180
    %v383 = vunpack.c.l.b16 %v181
    %v384 = vunpack.c.h.b16 %v181
    %v385 = vunpack.c.l.b16 %v182
    %v386 = vunpack.c.h.b16 %v182
    %v387 = vunpack.c.l.b16 %v183
    %v388 = vunpack.c.h.b16 %v183
    %v389 = vunpack.c.l.b16 %v184
    %v390 = vunpack.c.h.b16 %v184
    %v391 = vunpack.c.l.b16 %v185
    %v392 = vunpack.c.h.b16 %v185
    %v393 = vunpack.c.l.b16 %v186
    %v394 = vunpack.c.h.b16 %v186
    %v395 = vunpack.c.l.b16 %v187
    %v396 = vunpack.c.h.b16 %v187
    %v397 = vpack.c.b16 %v273, %v269
    %v398 = vpack.c.b16 %v274, %v270
    %v399 = vpack.c.b16 %v275, %v271
    %v400 = vpack.c.b16 %v276, %v272
    %v401 = vpack.c.b16 %v281, %v277
    %v402 = vpack.c.b16 %v282, %v278
    %v403 = vpack.c.b16 %v283, %v279
    %v404 = vpack.c.b16 %v284, %v280
    %v405 = vpack.c.b16 %v289, %v285
    %v406 = vpack.c.b16 %v290, %v286
    %v407 = vpack.c.b16 %v291, %v287
    %v408 = vpack.c.b16 %v292, %v288
    %v409 = vpack.c.b16 %v297, %v293
    %v410 = vpack.c.b16 %v298, %v294
    %v411 = vpack.c.b16 %v299, %v295
    %v412 = vpack.c.b16 %v300, %v296
    %v413 = vpack.c.b16 %v305, %v301
    %v414 = vpack.c.b16 %v306, %v302
    %v415 = vpack.c.b16 %v307, %v303
    %v416 = vpack.c.b16 %v308, %v304
    %v417 = vpack.c.b16 %v313, %v309
    %v418 = vpack.c.b16 %v314, %v310
    %v419 = vpack.c.b16 %v315, %v311
    %v420 = vpack.c.b16 %v316, %v312
    %v421 = vpack.c.b16 %v321, %v317
    %v422 = vpack.c.b16 %v322, %v318
    %v423 = vpack.c.b16 %v323, %v319
    %v424 = vpack.c.b16 %v324, %v320
    %v425 = vpack.c.b16 %v329, %v325
    %v426 = vpack.c.b16 %v330, %v326
    %v427 = vpack.c.b16 %v331, %v327
    %v428 = vpack.c.b16 %v332, %v328
    %v429 = vpack.c.b16 %v337, %v333
    %v430 = vpack.c.b16 %v338, %v334
    %v431 = vpack.c.b16 %v339, %v335
    %v432 = vpack.c.b16 %v340, %v336
    %v433 = vpack.c.b16 %v345, %v341
    %v434 = vpack.c.b16 %v346, %v342
    %v435 = vpack.c.b16 %v347, %v343
    %v436 = vpack.c.b16 %v348, %v344
    %v437 = vpack.c.b16 %v353, %v349
    %v438 = vpack.c.b16 %v354, %v350
    %v439 = vpack.c.b16 %v355, %v351
    %v440 = vpack.c.b16 %v356, %v352
    %v441 = vpack.c.b16 %v361, %v357
    %v442 = vpack.c.b16 %v362, %v358
    %v443 = vpack.c.b16 %v363, %v359
    %v444 = vpack.c.b16 %v364, %v360
    %v445 = vpack.c.b16 %v369, %v365
    %v446 = vpack.c.b16 %v370, %v366
    %v447 = vpack.c.b16 %v371, %v367
    %v448 = vpack.c.b16 %v372, %v368
    %v449 = vpack.c.b16 %v377, %v373
    %v450 = vpack.c.b16 %v378, %v374
    %v451 = vpack.c.b16 %v379, %v375
    %v452 = vpack.c.b16 %v380, %v376
    %v453 = vpack.c.b16 %v385, %v381
    %v454 = vpack.c.b16 %v386, %v382
    %v455 = vpack.c.b16 %v387, %v383
    %v456 = vpack.c.b16 %v388, %v384
    %v457 = vpack.c.b16 %v393, %v389
    %v458 = vpack.c.b16 %v394, %v390
    %v459 = vpack.c.b16 %v395, %v391
    %v460 = vpack.c.b16 %v396, %v392
    %525 = vmatpush.bf16.msra.mxu0 %v425
    %526 = vmatpush.bf16.msra.mxu0 %v421
    %527 = vmatpush.bf16.msra.mxu0 %v417
    %528 = vmatpush.bf16.msra.mxu0 %v413
    %529 = vmatpush.bf16.msra.mxu0 %v409
    %530 = vmatpush.bf16.msra.mxu0 %v405
    %531 = vmatpush.bf16.msra.mxu0 %v401
    %532 = vmatpush.bf16.msra.mxu0 %v397
    %533 = vmatmul.bf16.gmra.mxu0 %v201
    %v534 = vpop.f32.mrf.mxu0
    %v535 = vadd.f32 %v190, %v534
    %v536 = vpop.f32.mrf.mxu0
    %537 = vdwg.mxu0
    %538 = vmatpush.bf16.msra.mxu0 %v457
    %539 = vmatpush.bf16.msra.mxu0 %v453
    %540 = vmatpush.bf16.msra.mxu0 %v449
    %541 = vmatpush.bf16.msra.mxu0 %v445
    %542 = vmatpush.bf16.msra.mxu0 %v441
    %543 = vmatpush.bf16.msra.mxu0 %v437
    %544 = vmatpush.bf16.msra.mxu0 %v433
    %545 = vmatpush.bf16.msra.mxu0 %v429
    %546 = vmatmul.bf16.gmra.mxu0 %v202
    %v547 = vpop.f32.mrf.mxu0
    %v548 = vadd.f32 %v535, %v547
    %v549 = vpop.f32.mrf.mxu0
    %550 = vdwg.mxu0
    %551 = vmatpush.bf16.msra.mxu0 %v426
    %552 = vmatpush.bf16.msra.mxu0 %v422
    %553 = vmatpush.bf16.msra.mxu0 %v418
    %554 = vmatpush.bf16.msra.mxu0 %v414
    %555 = vmatpush.bf16.msra.mxu0 %v410
    %556 = vmatpush.bf16.msra.mxu0 %v406
    %557 = vmatpush.bf16.msra.mxu0 %v402
    %558 = vmatpush.bf16.msra.mxu0 %v398
    %559 = vmatmul.bf16.gmra.mxu0 %v201
    %v560 = vpop.f32.mrf.mxu0
    %v561 = vadd.f32 %v191, %v560
    %v562 = vpop.f32.mrf.mxu0
    %563 = vdwg.mxu0
    %564 = vmatpush.bf16.msra.mxu0 %v458
    %565 = vmatpush.bf16.msra.mxu0 %v454
    %566 = vmatpush.bf16.msra.mxu0 %v450
    %567 = vmatpush.bf16.msra.mxu0 %v446
    %568 = vmatpush.bf16.msra.mxu0 %v442
    %569 = vmatpush.bf16.msra.mxu0 %v438
    %570 = vmatpush.bf16.msra.mxu0 %v434
    %571 = vmatpush.bf16.msra.mxu0 %v430
    %572 = vmatmul.bf16.gmra.mxu0 %v202
    %v573 = vpop.f32.mrf.mxu0
    %v574 = vadd.f32 %v561, %v573
    %v575 = vpop.f32.mrf.mxu0
    %576 = vdwg.mxu0
    %577 = vmatpush.bf16.msra.mxu0 %v427
    %578 = vmatpush.bf16.msra.mxu0 %v423
    %579 = vmatpush.bf16.msra.mxu0 %v419
    %580 = vmatpush.bf16.msra.mxu0 %v415
    %581 = vmatpush.bf16.msra.mxu0 %v411
    %582 = vmatpush.bf16.msra.mxu0 %v407
    %583 = vmatpush.bf16.msra.mxu0 %v403
    %584 = vmatpush.bf16.msra.mxu0 %v399
    %585 = vmatmul.bf16.gmra.mxu0 %v201
    %v586 = vpop.f32.mrf.mxu0
    %v587 = vadd.f32 %v192, %v586
    %v588 = vpop.f32.mrf.mxu0
    %589 = vdwg.mxu0
    %590 = vmatpush.bf16.msra.mxu0 %v459
    %591 = vmatpush.bf16.msra.mxu0 %v455
    %592 = vmatpush.bf16.msra.mxu0 %v451
    %593 = vmatpush.bf16.msra.mxu0 %v447
    %594 = vmatpush.bf16.msra.mxu0 %v443
    %595 = vmatpush.bf16.msra.mxu0 %v439
    %596 = vmatpush.bf16.msra.mxu0 %v435
    %597 = vmatpush.bf16.msra.mxu0 %v431
    %598 = vmatmul.bf16.gmra.mxu0 %v202
    %v599 = vpop.f32.mrf.mxu0
    %v600 = vadd.f32 %v587, %v599
    %v601 = vpop.f32.mrf.mxu0
    %602 = vdwg.mxu0
    %603 = vmatpush.bf16.msra.mxu0 %v428
    %604 = vmatpush.bf16.msra.mxu0 %v424
    %605 = vmatpush.bf16.msra.mxu0 %v420
    %606 = vmatpush.bf16.msra.mxu0 %v416
    %607 = vmatpush.bf16.msra.mxu0 %v412
    %608 = vmatpush.bf16.msra.mxu0 %v408
    %609 = vmatpush.bf16.msra.mxu0 %v404
    %610 = vmatpush.bf16.msra.mxu0 %v400
    %611 = vmatmul.bf16.gmra.mxu0 %v201
    %v612 = vpop.f32.mrf.mxu0
    %v613 = vadd.f32 %v193, %v612
    %v614 = vpop.f32.mrf.mxu0
    %615 = vdwg.mxu0
    %616 = vmatpush.bf16.msra.mxu0 %v460
    %617 = vmatpush.bf16.msra.mxu0 %v456
    %618 = vmatpush.bf16.msra.mxu0 %v452
    %619 = vmatpush.bf16.msra.mxu0 %v448
    %620 = vmatpush.bf16.msra.mxu0 %v444
    %621 = vmatpush.bf16.msra.mxu0 %v440
    %622 = vmatpush.bf16.msra.mxu0 %v436
    %623 = vmatpush.bf16.msra.mxu0 %v432
    %624 = vmatmul.bf16.gmra.mxu0 %v202
    %v625 = vpop.f32.mrf.mxu0
    %v626 = vadd.f32 %v613, %v625
    %v627 = vpop.f32.mrf.mxu0
    %628 = vdwg.mxu0
    %v629 = vmax.f32 %v548, 0.0
    %v630 = vmax.f32 %v574, 0.0
    %v631 = vmax.f32 %v600, 0.0
    %v632 = vmax.f32 %v626, 0.0
    %v633 = vpack.c.bf16 %v629, %v629
    %v634 = vpack.c.bf16 %v630, %v630
    %v635 = vpack.c.bf16 %v631, %v631
    %v636 = vpack.c.bf16 %v632, %v632
    %v637 = vld [vmem:[#allocation8] sm:$0xff]
    %v638 = vld [vmem:[#allocation8 + $0x8] sm:$0xf]
    %v639 = vld [vmem:[#allocation8 + $0xc] sm:$0xff]
    %v640 = vld [vmem:[#allocation8 + $0x14] sm:$0xf]
    %v641 = vld [vmem:[#allocation8 + $0x18] sm:$0xff]
    %v642 = vld [vmem:[#allocation8 + $0x20] sm:$0xf]
    %v643 = vld [vmem:[#allocation8 + $0x24] sm:$0xff]
    %v644 = vld [vmem:[#allocation8 + $0x2c] sm:$0xf]
    %v645 = vld [vmem:[#allocation8 + $0x30] sm:$0xff]
    %v646 = vld [vmem:[#allocation8 + $0x38] sm:$0xf]
    %v647 = vld [vmem:[#allocation8 + $0x3c] sm:$0xff]
    %v648 = vld [vmem:[#allocation8 + $0x44] sm:$0xf]
    %v649 = vld [vmem:[#allocation8 + $0x48] sm:$0xff]
    %v650 = vld [vmem:[#allocation8 + $0x50] sm:$0xf]
    %v651 = vld [vmem:[#allocation8 + $0x54] sm:$0xff]
    %v652 = vld [vmem:[#allocation8 + $0x5c] sm:$0xf]
    %v653 = vld [vmem:[#allocation8 + $0x60] sm:$0xff]
    %v654 = vld [vmem:[#allocation8 + $0x68] sm:$0xf]
    %v655 = vld [vmem:[#allocation8 + $0x6c] sm:$0xff]
    %v656 = vld [vmem:[#allocation8 + $0x74] sm:$0xf]
    %v657 = vld [vmem:[#allocation8 + $0x78] sm:$0xff]
    %v658 = vld [vmem:[#allocation8 + $0x80] sm:$0xf]
    %v659 = vld [vmem:[#allocation8 + $0x84] sm:$0xff]
    %v660 = vld [vmem:[#allocation8 + $0x8c] sm:$0xf]
    %v661 = vld [vmem:[#allocation8 + $0x90] sm:$0xff]
    %v662 = vld [vmem:[#allocation8 + $0x98] sm:$0xf]
    %v663 = vld [vmem:[#allocation8 + $0x9c] sm:$0xff]
    %v664 = vld [vmem:[#allocation8 + $0xa4] sm:$0xf]
    %v665 = vld [vmem:[#allocation8 + $0xa8] sm:$0xff]
    %v666 = vld [vmem:[#allocation8 + $0xb0] sm:$0xf]
    %v667 = vld [vmem:[#allocation8 + $0xb4] sm:$0xff]
    %v668 = vld [vmem:[#allocation8 + $0xbc] sm:$0xf]
    %v669 = vld [vmem:[#allocation8 + $0xc0] sm:$0xff]
    %v670 = vld [vmem:[#allocation8 + $0xc8] sm:$0xf]
    %v671 = vld [vmem:[#allocation8 + $0xcc] sm:$0xff]
    %v672 = vld [vmem:[#allocation8 + $0xd4] sm:$0xf]
    %v673 = vld [vmem:[#allocation8 + $0xd8] sm:$0xff]
    %v674 = vld [vmem:[#allocation8 + $0xe0] sm:$0xf]
    %v675 = vld [vmem:[#allocation8 + $0xe4] sm:$0xff]
    %v676 = vld [vmem:[#allocation8 + $0xec] sm:$0xf]
    %v677 = vld [vmem:[#allocation8 + $0xf0] sm:$0xff]
    %v678 = vld [vmem:[#allocation8 + $0xf8] sm:$0xf]
    %v679 = vld [vmem:[#allocation8 + $0xfc] sm:$0xff]
    %v680 = vld [vmem:[#allocation8 + $0x104] sm:$0xf]
    %v681 = vld [vmem:[#allocation8 + $0x108] sm:$0xff]
    %v682 = vld [vmem:[#allocation8 + $0x110] sm:$0xf]
    %v683 = vld [vmem:[#allocation8 + $0x114] sm:$0xff]
    %v684 = vld [vmem:[#allocation8 + $0x11c] sm:$0xf]
    %v685 = vld [vmem:[#allocation8 + $0x120] sm:$0xff]
    %v686 = vld [vmem:[#allocation8 + $0x128] sm:$0xf]
    %v687 = vld [vmem:[#allocation8 + $0x12c] sm:$0xff]
    %v688 = vld [vmem:[#allocation8 + $0x134] sm:$0xf]
    %v689 = vld [vmem:[#allocation8 + $0x138] sm:$0xff]
    %v690 = vld [vmem:[#allocation8 + $0x140] sm:$0xf]
    %v691 = vld [vmem:[#allocation8 + $0x144] sm:$0xff]
    %v692 = vld [vmem:[#allocation8 + $0x14c] sm:$0xf]
    %v693 = vld [vmem:[#allocation8 + $0x150] sm:$0xff]
    %v694 = vld [vmem:[#allocation8 + $0x158] sm:$0xf]
    %v695 = vld [vmem:[#allocation8 + $0x15c] sm:$0xff]
    %v696 = vld [vmem:[#allocation8 + $0x164] sm:$0xf]
    %v697 = vld [vmem:[#allocation8 + $0x168] sm:$0xff]
    %v698 = vld [vmem:[#allocation8 + $0x170] sm:$0xf]
    %v699 = vld [vmem:[#allocation8 + $0x174] sm:$0xff]
    %v700 = vld [vmem:[#allocation8 + $0x17c] sm:$0xf]
    %v701 = vld [vmem:[#allocation8 + $0x180] sm:$0xff]
    %v702 = vld [vmem:[#allocation8 + $0x188] sm:$0xf]
    %v703 = vld [vmem:[#allocation8 + $0x18c] sm:$0xff]
    %v704 = vld [vmem:[#allocation8 + $0x194] sm:$0xf]
    %v705 = vld [vmem:[#allocation8 + $0x198] sm:$0xff]
    %v706 = vld [vmem:[#allocation8 + $0x1a0] sm:$0xf]
    %v707 = vld [vmem:[#allocation8 + $0x1a4] sm:$0xff]
    %v708 = vld [vmem:[#allocation8 + $0x1ac] sm:$0xf]
    %v709 = vld [vmem:[#allocation8 + $0x1b0] sm:$0xff]
    %v710 = vld [vmem:[#allocation8 + $0x1b8] sm:$0xf]
    %v711 = vld [vmem:[#allocation8 + $0x1bc] sm:$0xff]
    %v712 = vld [vmem:[#allocation8 + $0x1c4] sm:$0xf]
    %v713 = vld [vmem:[#allocation8 + $0x1c8] sm:$0xff]
    %v714 = vld [vmem:[#allocation8 + $0x1d0] sm:$0xf]
    %v715 = vld [vmem:[#allocation8 + $0x1d4] sm:$0xff]
    %v716 = vld [vmem:[#allocation8 + $0x1dc] sm:$0xf]
    %v717 = vld [vmem:[#allocation8 + $0x1e0] sm:$0xff]
    %v718 = vld [vmem:[#allocation8 + $0x1e8] sm:$0xf]
    %v719 = vld [vmem:[#allocation8 + $0x1ec] sm:$0xff]
    %v720 = vld [vmem:[#allocation8 + $0x1f4] sm:$0xf]
    %v721 = vld [vmem:[#allocation8 + $0x1f8] sm:$0xff]
    %v722 = vld [vmem:[#allocation8 + $0x200] sm:$0xf]
    %v723 = vld [vmem:[#allocation8 + $0x204] sm:$0xff]
    %v724 = vld [vmem:[#allocation8 + $0x20c] sm:$0xf]
    %v725 = vld [vmem:[#allocation8 + $0x210] sm:$0xff]
    %v726 = vld [vmem:[#allocation8 + $0x218] sm:$0xf]
    %v727 = vld [vmem:[#allocation8 + $0x21c] sm:$0xff]
    %v728 = vld [vmem:[#allocation8 + $0x224] sm:$0xf]
    %v729 = vld [vmem:[#allocation8 + $0x228] sm:$0xff]
    %v730 = vld [vmem:[#allocation8 + $0x230] sm:$0xf]
    %v731 = vld [vmem:[#allocation8 + $0x234] sm:$0xff]
    %v732 = vld [vmem:[#allocation8 + $0x23c] sm:$0xf]
    %v733 = vld [vmem:[#allocation8 + $0x240] sm:$0xff]
    %v734 = vld [vmem:[#allocation8 + $0x248] sm:$0xf]
    %v735 = vld [vmem:[#allocation8 + $0x24c] sm:$0xff]
    %v736 = vld [vmem:[#allocation8 + $0x254] sm:$0xf]
    %v737 = vld [vmem:[#allocation8 + $0x258] sm:$0xff]
    %v738 = vld [vmem:[#allocation8 + $0x260] sm:$0xf]
    %v739 = vld [vmem:[#allocation8 + $0x264] sm:$0xff]
    %v740 = vld [vmem:[#allocation8 + $0x26c] sm:$0xf]
    %v741 = vld [vmem:[#allocation8 + $0x270] sm:$0xff]
    %v742 = vld [vmem:[#allocation8 + $0x278] sm:$0xf]
    %v743 = vld [vmem:[#allocation8 + $0x27c] sm:$0xff]
    %v744 = vld [vmem:[#allocation8 + $0x284] sm:$0xf]
    %v745 = vld [vmem:[#allocation8 + $0x288] sm:$0xff]
    %v746 = vld [vmem:[#allocation8 + $0x290] sm:$0xf]
    %v747 = vld [vmem:[#allocation8 + $0x294] sm:$0xff]
    %v748 = vld [vmem:[#allocation8 + $0x29c] sm:$0xf]
    %v749 = vld [vmem:[#allocation8 + $0x2a0] sm:$0xff]
    %v750 = vld [vmem:[#allocation8 + $0x2a8] sm:$0xf]
    %v751 = vld [vmem:[#allocation8 + $0x2ac] sm:$0xff]
    %v752 = vld [vmem:[#allocation8 + $0x2b4] sm:$0xf]
    %v753 = vld [vmem:[#allocation8 + $0x2b8] sm:$0xff]
    %v754 = vld [vmem:[#allocation8 + $0x2c0] sm:$0xf]
    %v755 = vld [vmem:[#allocation8 + $0x2c4] sm:$0xff]
    %v756 = vld [vmem:[#allocation8 + $0x2cc] sm:$0xf]
    %v757 = vld [vmem:[#allocation8 + $0x2d0] sm:$0xff]
    %v758 = vld [vmem:[#allocation8 + $0x2d8] sm:$0xf]
    %v759 = vld [vmem:[#allocation8 + $0x2dc] sm:$0xff]
    %v760 = vld [vmem:[#allocation8 + $0x2e4] sm:$0xf]
    %v761 = vld [vmem:[#allocation8 + $0x2e8] sm:$0xff]
    %v762 = vld [vmem:[#allocation8 + $0x2f0] sm:$0xf]
    %v763 = vld [vmem:[#allocation8 + $0x2f4] sm:$0xff]
    %v764 = vld [vmem:[#allocation8 + $0x2fc] sm:$0xf]
    %v765 = vld [vmem:[%s4] sm:$0x7]
    %v767 = vperm.slane %v765, 0
    %v768 = vperm.slane %v765, 1
    %v769 = vperm.slane %v765, 2
    %v901 = vunpack.c.l.b16 %v637
    %v902 = vunpack.c.h.b16 %v637
    %v903 = vunpack.c.l.b16 %v638
    %v904 = vunpack.c.l.b16 %v639
    %v905 = vunpack.c.h.b16 %v639
    %v906 = vunpack.c.l.b16 %v640
    %v907 = vunpack.c.l.b16 %v641
    %v908 = vunpack.c.h.b16 %v641
    %v909 = vunpack.c.l.b16 %v642
    %v910 = vunpack.c.l.b16 %v643
    %v911 = vunpack.c.h.b16 %v643
    %v912 = vunpack.c.l.b16 %v644
    %v913 = vunpack.c.l.b16 %v645
    %v914 = vunpack.c.h.b16 %v645
    %v915 = vunpack.c.l.b16 %v646
    %v916 = vunpack.c.l.b16 %v647
    %v917 = vunpack.c.h.b16 %v647
    %v918 = vunpack.c.l.b16 %v648
    %v919 = vunpack.c.l.b16 %v649
    %v920 = vunpack.c.h.b16 %v649
    %v921 = vunpack.c.l.b16 %v650
    %v922 = vunpack.c.l.b16 %v651
    %v923 = vunpack.c.h.b16 %v651
    %v924 = vunpack.c.l.b16 %v652
    %v925 = vunpack.c.l.b16 %v653
    %v926 = vunpack.c.h.b16 %v653
    %v927 = vunpack.c.l.b16 %v654
    %v928 = vunpack.c.l.b16 %v655
    %v929 = vunpack.c.h.b16 %v655
    %v930 = vunpack.c.l.b16 %v656
    %v931 = vunpack.c.l.b16 %v657
    %v932 = vunpack.c.h.b16 %v657
    %v933 = vunpack.c.l.b16 %v658
    %v934 = vunpack.c.l.b16 %v659
    %v935 = vunpack.c.h.b16 %v659
    %v936 = vunpack.c.l.b16 %v660
    %v937 = vunpack.c.l.b16 %v661
    %v938 = vunpack.c.h.b16 %v661
    %v939 = vunpack.c.l.b16 %v662
    %v940 = vunpack.c.l.b16 %v663
    %v941 = vunpack.c.h.b16 %v663
    %v942 = vunpack.c.l.b16 %v664
    %v943 = vunpack.c.l.b16 %v665
    %v944 = vunpack.c.h.b16 %v665
    %v945 = vunpack.c.l.b16 %v666
    %v946 = vunpack.c.l.b16 %v667
    %v947 = vunpack.c.h.b16 %v667
    %v948 = vunpack.c.l.b16 %v668
    %v949 = vunpack.c.l.b16 %v669
    %v950 = vunpack.c.h.b16 %v669
    %v951 = vunpack.c.l.b16 %v670
    %v952 = vunpack.c.l.b16 %v671
    %v953 = vunpack.c.h.b16 %v671
    %v954 = vunpack.c.l.b16 %v672
    %v955 = vunpack.c.l.b16 %v673
    %v956 = vunpack.c.h.b16 %v673
    %v957 = vunpack.c.l.b16 %v674
    %v958 = vunpack.c.l.b16 %v675
    %v959 = vunpack.c.h.b16 %v675
    %v960 = vunpack.c.l.b16 %v676
    %v961 = vunpack.c.l.b16 %v677
    %v962 = vunpack.c.h.b16 %v677
    %v963 = vunpack.c.l.b16 %v678
    %v964 = vunpack.c.l.b16 %v679
    %v965 = vunpack.c.h.b16 %v679
    %v966 = vunpack.c.l.b16 %v680
    %v967 = vunpack.c.l.b16 %v681
    %v968 = vunpack.c.h.b16 %v681
    %v969 = vunpack.c.l.b16 %v682
    %v970 = vunpack.c.l.b16 %v683
    %v971 = vunpack.c.h.b16 %v683
    %v972 = vunpack.c.l.b16 %v684
    %v973 = vunpack.c.l.b16 %v685
    %v974 = vunpack.c.h.b16 %v685
    %v975 = vunpack.c.l.b16 %v686
    %v976 = vunpack.c.l.b16 %v687
    %v977 = vunpack.c.h.b16 %v687
    %v978 = vunpack.c.l.b16 %v688
    %v979 = vunpack.c.l.b16 %v689
    %v980 = vunpack.c.h.b16 %v689
    %v981 = vunpack.c.l.b16 %v690
    %v982 = vunpack.c.l.b16 %v691
    %v983 = vunpack.c.h.b16 %v691
    %v984 = vunpack.c.l.b16 %v692
    %v985 = vunpack.c.l.b16 %v693
    %v986 = vunpack.c.h.b16 %v693
    %v987 = vunpack.c.l.b16 %v694
    %v988 = vunpack.c.l.b16 %v695
    %v989 = vunpack.c.h.b16 %v695
    %v990 = vunpack.c.l.b16 %v696
    %v991 = vunpack.c.l.b16 %v697
    %v992 = vunpack.c.h.b16 %v697
    %v993 = vunpack.c.l.b16 %v698
    %v994 = vunpack.c.l.b16 %v699
    %v995 = vunpack.c.h.b16 %v699
    %v996 = vunpack.c.l.b16 %v700
    %v997 = vunpack.c.l.b16 %v701
    %v998 = vunpack.c.h.b16 %v701
    %v999 = vunpack.c.l.b16 %v702
    %v1000 = vunpack.c.l.b16 %v703
    %v1001 = vunpack.c.h.b16 %v703
    %v1002 = vunpack.c.l.b16 %v704
    %v1003 = vunpack.c.l.b16 %v705
    %v1004 = vunpack.c.h.b16 %v705
    %v1005 = vunpack.c.l.b16 %v706
    %v1006 = vunpack.c.l.b16 %v707
    %v1007 = vunpack.c.h.b16 %v707
    %v1008 = vunpack.c.l.b16 %v708
    %v1009 = vunpack.c.l.b16 %v709
    %v1010 = vunpack.c.h.b16 %v709
    %v1011 = vunpack.c.l.b16 %v710
    %v1012 = vunpack.c.l.b16 %v711
    %v1013 = vunpack.c.h.b16 %v711
    %v1014 = vunpack.c.l.b16 %v712
    %v1015 = vunpack.c.l.b16 %v713
    %v1016 = vunpack.c.h.b16 %v713
    %v1017 = vunpack.c.l.b16 %v714
    %v1018 = vunpack.c.l.b16 %v715
    %v1019 = vunpack.c.h.b16 %v715
    %v1020 = vunpack.c.l.b16 %v716
    %v1021 = vunpack.c.l.b16 %v717
    %v1022 = vunpack.c.h.b16 %v717
    %v1023 = vunpack.c.l.b16 %v718
    %v1024 = vunpack.c.l.b16 %v719
    %v1025 = vunpack.c.h.b16 %v719
    %v1026 = vunpack.c.l.b16 %v720
    %v1027 = vunpack.c.l.b16 %v721
    %v1028 = vunpack.c.h.b16 %v721
    %v1029 = vunpack.c.l.b16 %v722
    %v1030 = vunpack.c.l.b16 %v723
    %v1031 = vunpack.c.h.b16 %v723
    %v1032 = vunpack.c.l.b16 %v724
    %v1033 = vunpack.c.l.b16 %v725
    %v1034 = vunpack.c.h.b16 %v725
    %v1035 = vunpack.c.l.b16 %v726
    %v1036 = vunpack.c.l.b16 %v727
    %v1037 = vunpack.c.h.b16 %v727
    %v1038 = vunpack.c.l.b16 %v728
    %v1039 = vunpack.c.l.b16 %v729
    %v1040 = vunpack.c.h.b16 %v729
    %v1041 = vunpack.c.l.b16 %v730
    %v1042 = vunpack.c.l.b16 %v731
    %v1043 = vunpack.c.h.b16 %v731
    %v1044 = vunpack.c.l.b16 %v732
    %v1045 = vunpack.c.l.b16 %v733
    %v1046 = vunpack.c.h.b16 %v733
    %v1047 = vunpack.c.l.b16 %v734
    %v1048 = vunpack.c.l.b16 %v735
    %v1049 = vunpack.c.h.b16 %v735
    %v1050 = vunpack.c.l.b16 %v736
    %v1051 = vunpack.c.l.b16 %v737
    %v1052 = vunpack.c.h.b16 %v737
    %v1053 = vunpack.c.l.b16 %v738
    %v1054 = vunpack.c.l.b16 %v739
    %v1055 = vunpack.c.h.b16 %v739
    %v1056 = vunpack.c.l.b16 %v740
    %v1057 = vunpack.c.l.b16 %v741
    %v1058 = vunpack.c.h.b16 %v741
    %v1059 = vunpack.c.l.b16 %v742
    %v1060 = vunpack.c.l.b16 %v743
    %v1061 = vunpack.c.h.b16 %v743
    %v1062 = vunpack.c.l.b16 %v744
    %v1063 = vunpack.c.l.b16 %v745
    %v1064 = vunpack.c.h.b16 %v745
    %v1065 = vunpack.c.l.b16 %v746
    %v1066 = vunpack.c.l.b16 %v747
    %v1067 = vunpack.c.h.b16 %v747
    %v1068 = vunpack.c.l.b16 %v748
    %v1069 = vunpack.c.l.b16 %v749
    %v1070 = vunpack.c.h.b16 %v749
    %v1071 = vunpack.c.l.b16 %v750
    %v1072 = vunpack.c.l.b16 %v751
    %v1073 = vunpack.c.h.b16 %v751
    %v1074 = vunpack.c.l.b16 %v752
    %v1075 = vunpack.c.l.b16 %v753
    %v1076 = vunpack.c.h.b16 %v753
    %v1077 = vunpack.c.l.b16 %v754
    %v1078 = vunpack.c.l.b16 %v755
    %v1079 = vunpack.c.h.b16 %v755
    %v1080 = vunpack.c.l.b16 %v756
    %v1081 = vunpack.c.l.b16 %v757
    %v1082 = vunpack.c.h.b16 %v757
    %v1083 = vunpack.c.l.b16 %v758
    %v1084 = vunpack.c.l.b16 %v759
    %v1085 = vunpack.c.h.b16 %v759
    %v1086 = vunpack.c.l.b16 %v760
    %v1087 = vunpack.c.l.b16 %v761
    %v1088 = vunpack.c.h.b16 %v761
    %v1089 = vunpack.c.l.b16 %v762
    %v1090 = vunpack.c.l.b16 %v763
    %v1091 = vunpack.c.h.b16 %v763
    %v1092 = vunpack.c.l.b16 %v764
    %v1093 = vpack.c.b16 %v904, %v901
    %v1094 = vpack.c.b16 %v905, %v902
    %v1095 = vpack.c.b16 %v906, %v903
    %v1096 = vpack.c.b16 %v910, %v907
    %v1097 = vpack.c.b16 %v911, %v908
    %v1098 = vpack.c.b16 %v912, %v909
    %v1099 = vpack.c.b16 %v916, %v913
    %v1100 = vpack.c.b16 %v917, %v914
    %v1101 = vpack.c.b16 %v918, %v915
    %v1102 = vpack.c.b16 %v922, %v919
    %v1103 = vpack.c.b16 %v923, %v920
    %v1104 = vpack.c.b16 %v924, %v921
    %v1105 = vpack.c.b16 %v928, %v925
    %v1106 = vpack.c.b16 %v929, %v926
    %v1107 = vpack.c.b16 %v930, %v927
    %v1108 = vpack.c.b16 %v934, %v931
    %v1109 = vpack.c.b16 %v935, %v932
    %v1110 = vpack.c.b16 %v936, %v933
    %v1111 = vpack.c.b16 %v940, %v937
    %v1112 = vpack.c.b16 %v941, %v938
    %v1113 = vpack.c.b16 %v942, %v939
    %v1114 = vpack.c.b16 %v946, %v943
    %v1115 = vpack.c.b16 %v947, %v944
    %v1116 = vpack.c.b16 %v948, %v945
    %v1117 = vpack.c.b16 %v952, %v949
    %v1118 = vpack.c.b16 %v953, %v950
    %v1119 = vpack.c.b16 %v954, %v951
    %v1120 = vpack.c.b16 %v958, %v955
    %v1121 = vpack.c.b16 %v959, %v956
    %v1122 = vpack.c.b16 %v960, %v957
    %v1123 = vpack.c.b16 %v964, %v961
    %v1124 = vpack.c.b16 %v965, %v962
    %v1125 = vpack.c.b16 %v966, %v963
    %v1126 = vpack.c.b16 %v970, %v967
    %v1127 = vpack.c.b16 %v971, %v968
    %v1128 = vpack.c.b16 %v972, %v969
    %v1129 = vpack.c.b16 %v976, %v973
    %v1130 = vpack.c.b16 %v977, %v974
    %v1131 = vpack.c.b16 %v978, %v975
    %v1132 = vpack.c.b16 %v982, %v979
    %v1133 = vpack.c.b16 %v983, %v980
    %v1134 = vpack.c.b16 %v984, %v981
    %v1135 = vpack.c.b16 %v988, %v985
    %v1136 = vpack.c.b16 %v989, %v986
    %v1137 = vpack.c.b16 %v990, %v987
    %v1138 = vpack.c.b16 %v994, %v991
    %v1139 = vpack.c.b16 %v995, %v992
    %v1140 = vpack.c.b16 %v996, %v993
    %v1141 = vpack.c.b16 %v1000, %v997
    %v1142 = vpack.c.b16 %v1001, %v998
    %v1143 = vpack.c.b16 %v1002, %v999
    %v1144 = vpack.c.b16 %v1006, %v1003
    %v1145 = vpack.c.b16 %v1007, %v1004
    %v1146 = vpack.c.b16 %v1008, %v1005
    %v1147 = vpack.c.b16 %v1012, %v1009
    %v1148 = vpack.c.b16 %v1013, %v1010
    %v1149 = vpack.c.b16 %v1014, %v1011
    %v1150 = vpack.c.b16 %v1018, %v1015
    %v1151 = vpack.c.b16 %v1019, %v1016
    %v1152 = vpack.c.b16 %v1020, %v1017
    %v1153 = vpack.c.b16 %v1024, %v1021
    %v1154 = vpack.c.b16 %v1025, %v1022
    %v1155 = vpack.c.b16 %v1026, %v1023
    %v1156 = vpack.c.b16 %v1030, %v1027
    %v1157 = vpack.c.b16 %v1031, %v1028
    %v1158 = vpack.c.b16 %v1032, %v1029
    %v1159 = vpack.c.b16 %v1036, %v1033
    %v1160 = vpack.c.b16 %v1037, %v1034
    %v1161 = vpack.c.b16 %v1038, %v1035
    %v1162 = vpack.c.b16 %v1042, %v1039
    %v1163 = vpack.c.b16 %v1043, %v1040
    %v1164 = vpack.c.b16 %v1044, %v1041
    %v1165 = vpack.c.b16 %v1048, %v1045
    %v1166 = vpack.c.b16 %v1049, %v1046
    %v1167 = vpack.c.b16 %v1050, %v1047
    %v1168 = vpack.c.b16 %v1054, %v1051
    %v1169 = vpack.c.b16 %v1055, %v1052
    %v1170 = vpack.c.b16 %v1056, %v1053
    %v1171 = vpack.c.b16 %v1060, %v1057
    %v1172 = vpack.c.b16 %v1061, %v1058
    %v1173 = vpack.c.b16 %v1062, %v1059
    %v1174 = vpack.c.b16 %v1066, %v1063
    %v1175 = vpack.c.b16 %v1067, %v1064
    %v1176 = vpack.c.b16 %v1068, %v1065
    %v1177 = vpack.c.b16 %v1072, %v1069
    %v1178 = vpack.c.b16 %v1073, %v1070
    %v1179 = vpack.c.b16 %v1074, %v1071
    %v1180 = vpack.c.b16 %v1078, %v1075
    %v1181 = vpack.c.b16 %v1079, %v1076
    %v1182 = vpack.c.b16 %v1080, %v1077
    %v1183 = vpack.c.b16 %v1084, %v1081
    %v1184 = vpack.c.b16 %v1085, %v1082
    %v1185 = vpack.c.b16 %v1086, %v1083
    %v1186 = vpack.c.b16 %v1090, %v1087
    %v1187 = vpack.c.b16 %v1091, %v1088
    %v1188 = vpack.c.b16 %v1092, %v1089
    %1285 = vmatpush.bf16.msra.mxu0 %v1114
    %1286 = vmatpush.bf16.msra.mxu0 %v1111
    %1287 = vmatpush.bf16.msra.mxu0 %v1108
    %1288 = vmatpush.bf16.msra.mxu0 %v1105
    %1289 = vmatpush.bf16.msra.mxu0 %v1102
    %1290 = vmatpush.bf16.msra.mxu0 %v1099
    %1291 = vmatpush.bf16.msra.mxu0 %v1096
    %1292 = vmatpush.bf16.msra.mxu0 %v1093
    %1293 = vmatmul.bf16.gmra.mxu0 %v633
    %v1294 = vpop.f32.mrf.mxu0
    %v1295 = vadd.f32 %v767, %v1294
    %v1296 = vpop.f32.mrf.mxu0
    %1297 = vdwg.mxu0
    %1298 = vmatpush.bf16.msra.mxu0 %v1138
    %1299 = vmatpush.bf16.msra.mxu0 %v1135
    %1300 = vmatpush.bf16.msra.mxu0 %v1132
    %1301 = vmatpush.bf16.msra.mxu0 %v1129
    %1302 = vmatpush.bf16.msra.mxu0 %v1126
    %1303 = vmatpush.bf16.msra.mxu0 %v1123
    %1304 = vmatpush.bf16.msra.mxu0 %v1120
    %1305 = vmatpush.bf16.msra.mxu0 %v1117
    %1306 = vmatmul.bf16.gmra.mxu0 %v634
    %v1307 = vpop.f32.mrf.mxu0
    %v1308 = vadd.f32 %v1295, %v1307
    %v1309 = vpop.f32.mrf.mxu0
    %1310 = vdwg.mxu0
    %1311 = vmatpush.bf16.msra.mxu0 %v1162
    %1312 = vmatpush.bf16.msra.mxu0 %v1159
    %1313 = vmatpush.bf16.msra.mxu0 %v1156
    %1314 = vmatpush.bf16.msra.mxu0 %v1153
    %1315 = vmatpush.bf16.msra.mxu0 %v1150
    %1316 = vmatpush.bf16.msra.mxu0 %v1147
    %1317 = vmatpush.bf16.msra.mxu0 %v1144
    %1318 = vmatpush.bf16.msra.mxu0 %v1141
    %1319 = vmatmul.bf16.gmra.mxu0 %v635
    %v1320 = vpop.f32.mrf.mxu0
    %v1321 = vadd.f32 %v1308, %v1320
    %v1322 = vpop.f32.mrf.mxu0
    %1323 = vdwg.mxu0
    %1324 = vmatpush.bf16.msra.mxu0 %v1186
    %1325 = vmatpush.bf16.msra.mxu0 %v1183
    %1326 = vmatpush.bf16.msra.mxu0 %v1180
    %1327 = vmatpush.bf16.msra.mxu0 %v1177
    %1328 = vmatpush.bf16.msra.mxu0 %v1174
    %1329 = vmatpush.bf16.msra.mxu0 %v1171
    %1330 = vmatpush.bf16.msra.mxu0 %v1168
    %1331 = vmatpush.bf16.msra.mxu0 %v1165
    %1332 = vmatmul.bf16.gmra.mxu0 %v636
    %v1333 = vpop.f32.mrf.mxu0
    %v1334 = vadd.f32 %v1321, %v1333
    %v1335 = vpop.f32.mrf.mxu0
    %1336 = vdwg.mxu0
    %1337 = vmatpush.bf16.msra.mxu0 %v1115
    %1338 = vmatpush.bf16.msra.mxu0 %v1112
    %1339 = vmatpush.bf16.msra.mxu0 %v1109
    %1340 = vmatpush.bf16.msra.mxu0 %v1106
    %1341 = vmatpush.bf16.msra.mxu0 %v1103
    %1342 = vmatpush.bf16.msra.mxu0 %v1100
    %1343 = vmatpush.bf16.msra.mxu0 %v1097
    %1344 = vmatpush.bf16.msra.mxu0 %v1094
    %1345 = vmatmul.bf16.gmra.mxu0 %v633
    %v1346 = vpop.f32.mrf.mxu0
    %v1347 = vadd.f32 %v768, %v1346
    %v1348 = vpop.f32.mrf.mxu0
    %1349 = vdwg.mxu0
    %1350 = vmatpush.bf16.msra.mxu0 %v1139
    %1351 = vmatpush.bf16.msra.mxu0 %v1136
    %1352 = vmatpush.bf16.msra.mxu0 %v1133
    %1353 = vmatpush.bf16.msra.mxu0 %v1130
    %1354 = vmatpush.bf16.msra.mxu0 %v1127
    %1355 = vmatpush.bf16.msra.mxu0 %v1124
    %1356 = vmatpush.bf16.msra.mxu0 %v1121
    %1357 = vmatpush.bf16.msra.mxu0 %v1118
    %1358 = vmatmul.bf16.gmra.mxu0 %v634
    %v1359 = vpop.f32.mrf.mxu0
    %v1360 = vadd.f32 %v1347, %v1359
    %v1361 = vpop.f32.mrf.mxu0
    %1362 = vdwg.mxu0
    %1363 = vmatpush.bf16.msra.mxu0 %v1163
    %1364 = vmatpush.bf16.msra.mxu0 %v1160
    %1365 = vmatpush.bf16.msra.mxu0 %v1157
    %1366 = vmatpush.bf16.msra.mxu0 %v1154
    %1367 = vmatpush.bf16.msra.mxu0 %v1151
    %1368 = vmatpush.bf16.msra.mxu0 %v1148
    %1369 = vmatpush.bf16.msra.mxu0 %v1145
    %1370 = vmatpush.bf16.msra.mxu0 %v1142
    %1371 = vmatmul.bf16.gmra.mxu0 %v635
    %v1372 = vpop.f32.mrf.mxu0
    %v1373 = vadd.f32 %v1360, %v1372
    %v1374 = vpop.f32.mrf.mxu0
    %1375 = vdwg.mxu0
    %1376 = vmatpush.bf16.msra.mxu0 %v1187
    %1377 = vmatpush.bf16.msra.mxu0 %v1184
    %1378 = vmatpush.bf16.msra.mxu0 %v1181
    %1379 = vmatpush.bf16.msra.mxu0 %v1178
    %1380 = vmatpush.bf16.msra.mxu0 %v1175
    %1381 = vmatpush.bf16.msra.mxu0 %v1172
    %1382 = vmatpush.bf16.msra.mxu0 %v1169
    %1383 = vmatpush.bf16.msra.mxu0 %v1166
    %1384 = vmatmul.bf16.gmra.mxu0 %v636
    %v1385 = vpop.f32.mrf.mxu0
    %v1386 = vadd.f32 %v1373, %v1385
    %v1387 = vpop.f32.mrf.mxu0
    %1388 = vdwg.mxu0
    %1389 = vmatpush.bf16.msra.mxu0 %v1116
    %1390 = vmatpush.bf16.msra.mxu0 %v1113
    %1391 = vmatpush.bf16.msra.mxu0 %v1110
    %1392 = vmatpush.bf16.msra.mxu0 %v1107
    %1393 = vmatpush.bf16.msra.mxu0 %v1104
    %1394 = vmatpush.bf16.msra.mxu0 %v1101
    %1395 = vmatpush.bf16.msra.mxu0 %v1098
    %1396 = vmatpush.bf16.msra.mxu0 %v1095
    %1397 = vmatmul.bf16.gmra.mxu0 %v633
    %v1398 = vpop.f32.mrf.mxu0
    %v1399 = vadd.f32 %v769, %v1398
    %v1400 = vpop.f32.mrf.mxu0
    %1401 = vdwg.mxu0
    %1402 = vmatpush.bf16.msra.mxu0 %v1140
    %1403 = vmatpush.bf16.msra.mxu0 %v1137
    %1404 = vmatpush.bf16.msra.mxu0 %v1134
    %1405 = vmatpush.bf16.msra.mxu0 %v1131
    %1406 = vmatpush.bf16.msra.mxu0 %v1128
    %1407 = vmatpush.bf16.msra.mxu0 %v1125
    %1408 = vmatpush.bf16.msra.mxu0 %v1122
    %1409 = vmatpush.bf16.msra.mxu0 %v1119
    %1410 = vmatmul.bf16.gmra.mxu0 %v634
    %v1411 = vpop.f32.mrf.mxu0
    %v1412 = vadd.f32 %v1399, %v1411
    %v1413 = vpop.f32.mrf.mxu0
    %1414 = vdwg.mxu0
    %1415 = vmatpush.bf16.msra.mxu0 %v1164
    %1416 = vmatpush.bf16.msra.mxu0 %v1161
    %1417 = vmatpush.bf16.msra.mxu0 %v1158
    %1418 = vmatpush.bf16.msra.mxu0 %v1155
    %1419 = vmatpush.bf16.msra.mxu0 %v1152
    %1420 = vmatpush.bf16.msra.mxu0 %v1149
    %1421 = vmatpush.bf16.msra.mxu0 %v1146
    %1422 = vmatpush.bf16.msra.mxu0 %v1143
    %1423 = vmatmul.bf16.gmra.mxu0 %v635
    %v1424 = vpop.f32.mrf.mxu0
    %v1425 = vadd.f32 %v1412, %v1424
    %v1426 = vpop.f32.mrf.mxu0
    %1427 = vdwg.mxu0
    %1428 = vmatpush.bf16.msra.mxu0 %v1188
    %1429 = vmatpush.bf16.msra.mxu0 %v1185
    %1430 = vmatpush.bf16.msra.mxu0 %v1182
    %1431 = vmatpush.bf16.msra.mxu0 %v1179
    %1432 = vmatpush.bf16.msra.mxu0 %v1176
    %1433 = vmatpush.bf16.msra.mxu0 %v1173
    %1434 = vmatpush.bf16.msra.mxu0 %v1170
    %1435 = vmatpush.bf16.msra.mxu0 %v1167
    %1436 = vmatmul.bf16.gmra.mxu0 %v636
    %v1437 = vpop.f32.mrf.mxu0
    %v1438 = vadd.f32 %v1425, %v1437
    %v1439 = vpop.f32.mrf.mxu0
    %1440 = vdwg.mxu0
    %v1441 = vmax.f32 %v1334, 0.0
    %v1442 = vmax.f32 %v1386, 0.0
    %v1443 = vmax.f32 %v1438, 0.0
    %v1444 = vpack.c.bf16 %v1441, %v1441
    %v1445 = vpack.c.bf16 %v1442, %v1442
    %v1446 = vpack.c.bf16 %v1443, %v1443
    %v1447 = vld [vmem:[#allocation10] sm:$0xf]
    %v1448 = vld [vmem:[#allocation10 + $0x4] sm:$0xf]
    %v1449 = vld [vmem:[#allocation10 + $0x8] sm:$0xf]
    %v1450 = vld [vmem:[#allocation10 + $0xc] sm:$0xf]
    %v1451 = vld [vmem:[#allocation10 + $0x10] sm:$0xf]
    %v1452 = vld [vmem:[#allocation10 + $0x14] sm:$0xf]
    %v1453 = vld [vmem:[#allocation10 + $0x18] sm:$0xf]
    %v1454 = vld [vmem:[#allocation10 + $0x1c] sm:$0xf]
    %v1455 = vld [vmem:[#allocation10 + $0x20] sm:$0xf]
    %v1456 = vld [vmem:[#allocation10 + $0x24] sm:$0xf]
    %v1457 = vld [vmem:[#allocation10 + $0x28] sm:$0xf]
    %v1458 = vld [vmem:[#allocation10 + $0x2c] sm:$0xf]
    %v1459 = vld [vmem:[#allocation10 + $0x30] sm:$0xf]
    %v1460 = vld [vmem:[#allocation10 + $0x34] sm:$0xf]
    %v1461 = vld [vmem:[#allocation10 + $0x38] sm:$0xf]
    %v1462 = vld [vmem:[#allocation10 + $0x3c] sm:$0xf]
    %v1463 = vld [vmem:[#allocation10 + $0x40] sm:$0xf]
    %v1464 = vld [vmem:[#allocation10 + $0x44] sm:$0xf]
    %v1465 = vld [vmem:[#allocation10 + $0x48] sm:$0xf]
    %v1466 = vld [vmem:[#allocation10 + $0x4c] sm:$0xf]
    %v1467 = vld [vmem:[#allocation10 + $0x50] sm:$0xf]
    %v1468 = vld [vmem:[#allocation10 + $0x54] sm:$0xf]
    %v1469 = vld [vmem:[#allocation10 + $0x58] sm:$0xf]
    %v1470 = vld [vmem:[#allocation10 + $0x5c] sm:$0xf]
    %v1471 = vld [vmem:[#allocation10 + $0x60] sm:$0xf]
    %v1472 = vld [vmem:[#allocation10 + $0x64] sm:$0xf]
    %v1473 = vld [vmem:[#allocation10 + $0x68] sm:$0xf]
    %v1474 = vld [vmem:[#allocation10 + $0x6c] sm:$0xf]
    %v1475 = vld [vmem:[#allocation10 + $0x70] sm:$0xf]
    %v1476 = vld [vmem:[#allocation10 + $0x74] sm:$0xf]
    %v1477 = vld [vmem:[#allocation10 + $0x78] sm:$0xf]
    %v1478 = vld [vmem:[#allocation10 + $0x7c] sm:$0xf]
    %v1479 = vld [vmem:[#allocation10 + $0x80] sm:$0xf]
    %v1480 = vld [vmem:[#allocation10 + $0x84] sm:$0xf]
    %v1481 = vld [vmem:[#allocation10 + $0x88] sm:$0xf]
    %v1482 = vld [vmem:[#allocation10 + $0x8c] sm:$0xf]
    %v1483 = vld [vmem:[#allocation10 + $0x90] sm:$0xf]
    %v1484 = vld [vmem:[#allocation10 + $0x94] sm:$0xf]
    %v1485 = vld [vmem:[#allocation10 + $0x98] sm:$0xf]
    %v1486 = vld [vmem:[#allocation10 + $0x9c] sm:$0xf]
    %v1487 = vld [vmem:[#allocation10 + $0xa0] sm:$0xf]
    %v1488 = vld [vmem:[#allocation10 + $0xa4] sm:$0xf]
    %v1489 = vld [vmem:[#allocation10 + $0xa8] sm:$0xf]
    %v1490 = vld [vmem:[#allocation10 + $0xac] sm:$0xf]
    %v1491 = vld [vmem:[#allocation10 + $0xb0] sm:$0xf]
    %v1492 = vld [vmem:[#allocation10 + $0xb4] sm:$0xf]
    %v1493 = vld [vmem:[#allocation10 + $0xb8] sm:$0xf]
    %v1494 = vld [vmem:[#allocation10 + $0xbc] sm:$0xf]
    %v1495 = vld [vmem:[%s6] sm:$0x1]
    %v1497 = vperm.slane %v1495, 0
    %v1547 = vunpack.c.l.b16 %v1447
    %v1548 = vunpack.c.l.b16 %v1448
    %v1549 = vunpack.c.l.b16 %v1449
    %v1550 = vunpack.c.l.b16 %v1450
    %v1551 = vunpack.c.l.b16 %v1451
    %v1552 = vunpack.c.l.b16 %v1452
    %v1553 = vunpack.c.l.b16 %v1453
    %v1554 = vunpack.c.l.b16 %v1454
    %v1555 = vunpack.c.l.b16 %v1455
    %v1556 = vunpack.c.l.b16 %v1456
    %v1557 = vunpack.c.l.b16 %v1457
    %v1558 = vunpack.c.l.b16 %v1458
    %v1559 = vunpack.c.l.b16 %v1459
    %v1560 = vunpack.c.l.b16 %v1460
    %v1561 = vunpack.c.l.b16 %v1461
    %v1562 = vunpack.c.l.b16 %v1462
    %v1563 = vunpack.c.l.b16 %v1463
    %v1564 = vunpack.c.l.b16 %v1464
    %v1565 = vunpack.c.l.b16 %v1465
    %v1566 = vunpack.c.l.b16 %v1466
    %v1567 = vunpack.c.l.b16 %v1467
    %v1568 = vunpack.c.l.b16 %v1468
    %v1569 = vunpack.c.l.b16 %v1469
    %v1570 = vunpack.c.l.b16 %v1470
    %v1571 = vunpack.c.l.b16 %v1471
    %v1572 = vunpack.c.l.b16 %v1472
    %v1573 = vunpack.c.l.b16 %v1473
    %v1574 = vunpack.c.l.b16 %v1474
    %v1575 = vunpack.c.l.b16 %v1475
    %v1576 = vunpack.c.l.b16 %v1476
    %v1577 = vunpack.c.l.b16 %v1477
    %v1578 = vunpack.c.l.b16 %v1478
    %v1579 = vunpack.c.l.b16 %v1479
    %v1580 = vunpack.c.l.b16 %v1480
    %v1581 = vunpack.c.l.b16 %v1481
    %v1582 = vunpack.c.l.b16 %v1482
    %v1583 = vunpack.c.l.b16 %v1483
    %v1584 = vunpack.c.l.b16 %v1484
    %v1585 = vunpack.c.l.b16 %v1485
    %v1586 = vunpack.c.l.b16 %v1486
    %v1587 = vunpack.c.l.b16 %v1487
    %v1588 = vunpack.c.l.b16 %v1488
    %v1589 = vunpack.c.l.b16 %v1489
    %v1590 = vunpack.c.l.b16 %v1490
    %v1591 = vunpack.c.l.b16 %v1491
    %v1592 = vunpack.c.l.b16 %v1492
    %v1593 = vunpack.c.l.b16 %v1493
    %v1594 = vunpack.c.l.b16 %v1494
    %v1595 = vpack.c.b16 %v1548, %v1547
    %v1596 = vpack.c.b16 %v1550, %v1549
    %v1597 = vpack.c.b16 %v1552, %v1551
    %v1598 = vpack.c.b16 %v1554, %v1553
    %v1599 = vpack.c.b16 %v1556, %v1555
    %v1600 = vpack.c.b16 %v1558, %v1557
    %v1601 = vpack.c.b16 %v1560, %v1559
    %v1602 = vpack.c.b16 %v1562, %v1561
    %v1603 = vpack.c.b16 %v1564, %v1563
    %v1604 = vpack.c.b16 %v1566, %v1565
    %v1605 = vpack.c.b16 %v1568, %v1567
    %v1606 = vpack.c.b16 %v1570, %v1569
    %v1607 = vpack.c.b16 %v1572, %v1571
    %v1608 = vpack.c.b16 %v1574, %v1573
    %v1609 = vpack.c.b16 %v1576, %v1575
    %v1610 = vpack.c.b16 %v1578, %v1577
    %v1611 = vpack.c.b16 %v1580, %v1579
    %v1612 = vpack.c.b16 %v1582, %v1581
    %v1613 = vpack.c.b16 %v1584, %v1583
    %v1614 = vpack.c.b16 %v1586, %v1585
    %v1615 = vpack.c.b16 %v1588, %v1587
    %v1616 = vpack.c.b16 %v1590, %v1589
    %v1617 = vpack.c.b16 %v1592, %v1591
    %v1618 = vpack.c.b16 %v1594, %v1593
    %1643 = vmatpush.bf16.msra.mxu0 %v1602
    %1644 = vmatpush.bf16.msra.mxu0 %v1601
    %1645 = vmatpush.bf16.msra.mxu0 %v1600
    %1646 = vmatpush.bf16.msra.mxu0 %v1599
    %1647 = vmatpush.bf16.msra.mxu0 %v1598
    %1648 = vmatpush.bf16.msra.mxu0 %v1597
    %1649 = vmatpush.bf16.msra.mxu0 %v1596
    %1650 = vmatpush.bf16.msra.mxu0 %v1595
    %1651 = vmatmul.bf16.gmra.mxu0 %v1444
    %v1652 = vpop.f32.mrf.mxu0
    %v1653 = vadd.f32 %v1497, %v1652
    %v1654 = vpop.f32.mrf.mxu0
    %1655 = vdwg.mxu0
    %1656 = vmatpush.bf16.msra.mxu0 %v1610
    %1657 = vmatpush.bf16.msra.mxu0 %v1609
    %1658 = vmatpush.bf16.msra.mxu0 %v1608
    %1659 = vmatpush.bf16.msra.mxu0 %v1607
    %1660 = vmatpush.bf16.msra.mxu0 %v1606
    %1661 = vmatpush.bf16.msra.mxu0 %v1605
    %1662 = vmatpush.bf16.msra.mxu0 %v1604
    %1663 = vmatpush.bf16.msra.mxu0 %v1603
    %1664 = vmatmul.bf16.gmra.mxu0 %v1445
    %v1665 = vpop.f32.mrf.mxu0
    %v1666 = vadd.f32 %v1653, %v1665
    %v1667 = vpop.f32.mrf.mxu0
    %1668 = vdwg.mxu0
    %1669 = vmatpush.bf16.msra.mxu0 %v1618
    %1670 = vmatpush.bf16.msra.mxu0 %v1617
    %1671 = vmatpush.bf16.msra.mxu0 %v1616
    %1672 = vmatpush.bf16.msra.mxu0 %v1615
    %1673 = vmatpush.bf16.msra.mxu0 %v1614
    %1674 = vmatpush.bf16.msra.mxu0 %v1613
    %1675 = vmatpush.bf16.msra.mxu0 %v1612
    %1676 = vmatpush.bf16.msra.mxu0 %v1611
    %1677 = vmatmul.bf16.gmra.mxu0 %v1446
    %v1678 = vpop.f32.mrf.mxu0
    %v1679 = vadd.f32 %v1666, %v1678
    %v1680 = vpop.f32.mrf.mxu0
    %1681 = vdwg.mxu0
    %v1682 = vmax.f32 %v1679, 0.0
    %v1683 = vpack.c.bf16 %v1682, %v1682
    %v1684 = vld [vmem:[#allocation11] sm:$0xf]
    %v1685 = vld [vmem:[#allocation11 + $0x4] sm:$0xf]
    %v1686 = vld [vmem:[#allocation11 + $0x8] sm:$0xf]
    %v1687 = vld [vmem:[#allocation11 + $0xc] sm:$0xf]
    %v1688 = vld [vmem:[#allocation11 + $0x10] sm:$0xf]
    %v1689 = vld [vmem:[#allocation11 + $0x14] sm:$0xf]
    %v1690 = vld [vmem:[#allocation11 + $0x18] sm:$0xf]
    %v1691 = vld [vmem:[#allocation11 + $0x1c] sm:$0xf]
    %v1692 = vld [vmem:[#allocation11 + $0x20] sm:$0xf]
    %v1693 = vld [vmem:[#allocation11 + $0x24] sm:$0xf]
    %v1694 = vld [vmem:[#allocation11 + $0x28] sm:$0xf]
    %v1695 = vld [vmem:[#allocation11 + $0x2c] sm:$0xf]
    %v1696 = vld [vmem:[#allocation11 + $0x30] sm:$0xf]
    %v1697 = vld [vmem:[#allocation11 + $0x34] sm:$0xf]
    %v1698 = vld [vmem:[#allocation11 + $0x38] sm:$0xf]
    %v1699 = vld [vmem:[#allocation11 + $0x3c] sm:$0xf]
    %v1700 = vld [vmem:[%s8] sm:$0x1]
    %v1702 = vperm.slane %v1700, 0
    %v1720 = vunpack.c.l.b16 %v1684
    %v1721 = vunpack.c.l.b16 %v1685
    %v1722 = vunpack.c.l.b16 %v1686
    %v1723 = vunpack.c.l.b16 %v1687
    %v1724 = vunpack.c.l.b16 %v1688
    %v1725 = vunpack.c.l.b16 %v1689
    %v1726 = vunpack.c.l.b16 %v1690
    %v1727 = vunpack.c.l.b16 %v1691
    %v1728 = vunpack.c.l.b16 %v1692
    %v1729 = vunpack.c.l.b16 %v1693
    %v1730 = vunpack.c.l.b16 %v1694
    %v1731 = vunpack.c.l.b16 %v1695
    %v1732 = vunpack.c.l.b16 %v1696
    %v1733 = vunpack.c.l.b16 %v1697
    %v1734 = vunpack.c.l.b16 %v1698
    %v1735 = vunpack.c.l.b16 %v1699
    %v1736 = vpack.c.b16 %v1721, %v1720
    %v1737 = vpack.c.b16 %v1723, %v1722
    %v1738 = vpack.c.b16 %v1725, %v1724
    %v1739 = vpack.c.b16 %v1727, %v1726
    %v1740 = vpack.c.b16 %v1729, %v1728
    %v1741 = vpack.c.b16 %v1731, %v1730
    %v1742 = vpack.c.b16 %v1733, %v1732
    %v1743 = vpack.c.b16 %v1735, %v1734
    %1752 = vmatpush.bf16.msra.mxu0 %v1743
    %1753 = vmatpush.bf16.msra.mxu0 %v1742
    %1754 = vmatpush.bf16.msra.mxu0 %v1741
    %1755 = vmatpush.bf16.msra.mxu0 %v1740
    %1756 = vmatpush.bf16.msra.mxu0 %v1739
    %1757 = vmatpush.bf16.msra.mxu0 %v1738
    %1758 = vmatpush.bf16.msra.mxu0 %v1737
    %1759 = vmatpush.bf16.msra.mxu0 %v1736
    %1760 = vmatmul.bf16.gmra.mxu0 %v1683
    %v1761 = vpop.f32.mrf.mxu0
    %v1762 = vadd.f32 %v1702, %v1761
    %v1763 = vpop.f32.mrf.mxu0
    %1764 = vdwg.mxu0
    %v1765 = vtanh.pop %v1762
    %1766 = vst [vmem:[#allocation13] sm:$0xff] %v1765
    // Predicated region
    $region62: #{tpu_custom_call.1} parent=1 // pred_check
      _
    $region63: #{tpu_custom_call.1} parent=1 // pred_check_branch
      %1768 = sbr.rel (0) target = $region65
    $region64: #{tpu_custom_call.1} parent=1 // pred_region
      %1770 = vsyncadd [#allocation4], 0
      %s1772 = sshll.u32 [#allocation13], 4
      %s1773 = int_to_ptr.vmem [resolvable:$true] %s1772
      %s1774 = sshll.u32 %s9, 4
      %s1775 = int_to_ptr.hbm [resolvable:$true] %s1774
      %1777 = dma.vmem_to_hbm [thread:$0]  %s1773, 128, %s1775, [#allocation4]
    $region65: #{tpu_custom_call.1} parent=1 // pred_fallthru
      _
    // Predicated region
    $region66: #{tpu_custom_call.1} parent=1 // pred_check
      _
    $region67: #{tpu_custom_call.1} parent=1 // pred_check_branch
      %1779 = sbr.rel (0) target = $region69
    $region68: #{tpu_custom_call.1} parent=1 // pred_region
      %1781 = dma.done [#allocation4], 128
    $region69: #{tpu_custom_call.1} parent=1 // pred_fallthru
      _
    %1782 = vsyncpa [#allocation3], 1
    %1783 = vsyncpa [#allocation6], 1
    %1784 = vsyncpa [#allocation9], 1
    %1785 = vsyncpa [#allocation12], 1
    %1786 = vsyncpa [#allocation4], 1

</llo_original>
